<compile_context>
chip_gen: v5e
topology: v5e:2x2
jax: 0.10.0
libtpu: 0.0.40
codegen_flags: <defaults>
</compile_context>

<pallas_src>
import functools

import numpy as np
import jax
import jax.numpy as jnp
from jax.experimental import pallas as pl
from jax.experimental.pallas import tpu as pltpu


# -----------------------------------------------------------------------------
# Parameter initialisation (same shapes / scales as the PyTorch module)
# -----------------------------------------------------------------------------
def init_params(key, in_channels, feature_size, num_channels, latent_channels,
                spatial_dims=2):
    keys = jax.random.split(key, 16)
    ki = iter(range(16))
    params = {"conv": []}
    cin = in_channels
    for cout in num_channels:
        w = jax.random.normal(keys[next(ki)], (cout, cin, 3, 3), jnp.float32)
        w = w * (0.1 / jnp.sqrt(9.0 * cin))
        b = 0.01 * jax.random.normal(keys[next(ki)], (cout,), jnp.float32)
        params["conv"].append((w, b))
        cin = cout
    flat_dim = int(num_channels[-1] *
                   (feature_size / 2 ** len(num_channels)) ** spatial_dims)

    def linear(kw, kb, out_dim, in_dim):
        w = jax.random.normal(keys[kw], (out_dim, in_dim), jnp.float32)
        w = w * (0.1 / jnp.sqrt(float(in_dim)))
        b = 0.01 * jax.random.normal(keys[kb], (out_dim,), jnp.float32)
        return w, b

    params["z_mu_fc_w"], params["z_mu_fc_b"] = linear(next(ki), next(ki), 128, flat_dim)
    params["z_mu_w"], params["z_mu_b"] = linear(next(ki), next(ki), latent_channels, 128)
    params["z_var_fc_w"], params["z_var_fc_b"] = linear(next(ki), next(ki), 128, flat_dim)
    params["z_var_w"], params["z_var_b"] = linear(next(ki), next(ki), latent_channels, 128)
    return params


# -----------------------------------------------------------------------------
# Trace-time parameter packing (all layout plumbing happens here, not at runtime)
# -----------------------------------------------------------------------------
def _pack_conv_layer(weight, bias, meta, last):
    """Fold the 3 kw taps of one 3x3 / stride-2 / pad-1 conv into three
    (L_in, n_cols) matmul operands, one per kernel row kh.  Rows index the
    W-phase-split input lanes; columns are either the next layer's W-phase-split
    input lanes (W zero-pad lanes folded in as all-zero columns) or the dense
    (w, c) order for the last conv layer (feeds the flatten)."""
    c_out, c_in = weight.shape[0], weight.shape[1]
    w_in, w_out = meta["w_in"], meta["w_out"]
    half_in = w_in // 2 + 1
    l_in = 2 * half_in * c_in
    if last:
        n_cols = w_out * c_out

        def col_of(wo):
            return wo * c_out + np.arange(c_out)
    else:
        half_out = w_out // 2 + 1
        n_cols = 2 * half_out * c_out

        def col_of(wo):
            j = wo + 1                      # padded column index of next layer input
            return (j % 2) * half_out * c_out + (j // 2) * c_out + np.arange(c_out)

    wk = np.zeros((3, l_in, n_cols), np.float32)
    for kh in range(3):
        for kw in range(3):
            tap = weight[:, :, kh, kw].T                     # (c_in, c_out)
            for wo in range(w_out):
                j = 2 * wo + kw                              # padded input column
                rows = (j % 2) * half_in * c_in + (j // 2) * c_in + np.arange(c_in)
                wk[kh][np.ix_(rows, col_of(wo))] += tap
    brow = np.zeros((1, n_cols), np.float32)
    for wo in range(w_out):
        brow[0, col_of(wo)] = bias
    return wk, brow


def pack_params(params, in_channels, feature_size, num_channels, latent_channels,
                spatial_dims=2):
    assert spatial_dims == 2, "TODO(synk): spatial_dims=3 conv stack not implemented"
    n_conv = len(num_channels)
    assert feature_size % (2 ** n_conv) == 0, (
        "feature_size must be divisible by 2**len(num_channels)")

    # Per-layer dimensions.
    conv_meta = []
    h = w = feature_size
    c_in = in_channels
    for l, c_out in enumerate(num_channels):
        h_out, w_out = h // 2, w // 2
        l_in = 2 * (w // 2 + 1) * c_in
        n_cols = (w_out * c_out) if l == n_conv - 1 else 2 * (w_out // 2 + 1) * c_out
        conv_meta.append(dict(h_in=h, w_in=w, c_in=c_in, c_out=c_out,
                              h_out=h_out, w_out=w_out, l_in=l_in, n_cols=n_cols))
        h, w, c_in = h_out, w_out, c_out

    # Row-emission order per layer: layer l emits its output rows so that each of
    # the next layer's three kh input row-blocks is a contiguous slice (plus zero
    # rows at the H boundary).
    orders = [None] * n_conv
    orders[n_conv - 1] = list(range(conv_meta[-1]["h_out"]))
    for l in range(n_conv - 1, 0, -1):
        orders[l - 1] = [2 * r for r in orders[l]] + [2 * r + 1 for r in orders[l]]

    # Chunk plans: how layer l (l>=1) assembles its kh LHS blocks from the previous
    # layer's emitted rows. Each chunk is ("zero", length) or ("data", start, length)
    # in emission-position units.
    plans = [None] * n_conv
    for l in range(1, n_conv):
        h_prev = conv_meta[l - 1]["h_out"]
        pos_of = {row: i for i, row in enumerate(orders[l - 1])}
        per_kh = []
        for kh in range(3):
            toks = []
            for r in orders[l]:
                src = 2 * r + kh - 1
                toks.append(None if (src < 0 or src >= h_prev) else pos_of[src])
            chunks, i = [], 0
            while i < len(toks):
                if toks[i] is None:
                    j = i
                    while j < len(toks) and toks[j] is None:
                        j += 1
                    chunks.append(("zero", j - i))
                    i = j
                else:
                    j = i
                    while j + 1 < len(toks) and toks[j + 1] == toks[j] + 1:
                        j += 1
                    chunks.append(("data", toks[i], j - i + 1))
                    i = j + 1
            per_kh.append(chunks)
        plans[l] = per_kh

    # Conv weights (bf16 operands, f32 bias rows).
    conv_w, conv_b = [], []
    for l, (cw, cb) in enumerate(params["conv"]):
        wk, brow = _pack_conv_layer(np.asarray(cw), np.asarray(cb),
                                    conv_meta[l], last=(l == n_conv - 1))
        conv_w.append(jnp.asarray(wk, dtype=jnp.bfloat16))
        conv_b.append(jnp.asarray(brow, dtype=jnp.float32))

    # FC heads: stage 1 packed as one (H_last, W*C, 2*hid) operand whose row blocks
    # are accumulated over the conv-output rows (flatten without lane concat).
    meta_l = conv_meta[-1]
    hl, wl, cl = meta_l["h_out"], meta_l["w_out"], meta_l["c_out"]
    d2 = wl * cl
    hid = params["z_mu_fc_w"].shape[0]
    lat = latent_channels

    w1 = np.concatenate([np.asarray(params["z_mu_fc_w"]),
                         np.asarray(params["z_var_fc_w"])], axis=0)      # (2*hid, flat)
    b1 = np.concatenate([np.asarray(params["z_mu_fc_b"]),
                         np.asarray(params["z_var_fc_b"])])
    wh1 = np.zeros((hl, d2, 2 * hid), np.float32)
    for hh in range(hl):
        for wo in range(wl):
            for c in range(cl):
                # kernel lane order (w, c)  vs  PyTorch NCHW flatten (c, h, w)
                wh1[hh, wo * cl + c, :] = w1[:, c * (hl * wl) + hh * wl + wo]
    bh1 = b1.reshape(1, 2 * hid)

    # Stage 2: mu -> lanes [lat:2lat), logvar -> lanes [2lat:3lat) of a 128-wide slab.
    out_lanes = 128 * int(np.ceil(3 * lat / 128.0))
    wh2 = np.zeros((2 * hid, out_lanes), np.float32)
    wh2[:hid, lat:2 * lat] = np.asarray(params["z_mu_w"]).T
    wh2[hid:, 2 * lat:3 * lat] = np.asarray(params["z_var_w"]).T
    bh2 = np.zeros((1, out_lanes), np.float32)
    bh2[0, lat:2 * lat] = np.asarray(params["z_mu_b"])
    bh2[0, 2 * lat:3 * lat] = np.asarray(params["z_var_b"])

    return dict(
        conv_meta=conv_meta, orders0=orders[0], plans=plans,
        conv_w=conv_w, conv_b=conv_b,
        wh1=jnp.asarray(wh1, jnp.bfloat16), bh1=jnp.asarray(bh1, jnp.float32),
        wh2=jnp.asarray(wh2, jnp.bfloat16), bh2=jnp.asarray(bh2, jnp.float32),
        latent=lat, out_lanes=out_lanes)


def pack_input(x_nchw, conv_meta, orders0):
    """NCHW -> (3, H0/2, N, L0): for kernel row kh, row p holds padded input row
    2*orders0[p]+kh of each sample, W-padded and split into even/odd W phases so
    every 3x3 tap is already a column of the pre-packed layer-1 weight."""
    n, c, h, w = x_nchw.shape
    meta = conv_meta[0]
    assert (c, h, w) == (meta["c_in"], meta["h_in"], meta["w_in"])
    half = w // 2 + 1
    xh = jnp.transpose(x_nchw, (0, 2, 3, 1))                    # NHWC
    xp = jnp.pad(xh, ((0, 0), (1, 1), (1, 1), (0, 0)))          # pad H and W by 1
    xs = xp.reshape(n, h + 2, half, 2, c)                       # padded col j -> (j//2, j%2)
    xs = jnp.transpose(xs, (0, 1, 3, 2, 4)).reshape(n, h + 2, 2 * half * c)
    rows = np.asarray([[2 * r + kh for r in orders0] for kh in range(3)], np.int32)
    xg = xs[:, rows, :]                                         # (n, 3, H0/2, L0)
    return jnp.transpose(xg, (1, 2, 0, 3))                      # (3, H0/2, n, L0)


def _default_batch_block(n):
    if n <= 8:
        return 8
    # ~two grid steps (feeds both v7x TensorCores), sublane-aligned block.
    return min(128, 8 * int(np.ceil(n / 16.0)))


# -----------------------------------------------------------------------------
# Fused Pallas kernel: conv stack + flatten + FC heads + reparameterization
# -----------------------------------------------------------------------------
def _make_kernel(packed, b_blk):
    conv_meta = packed["conv_meta"]
    plans = packed["plans"]
    n_conv = len(conv_meta)
    lat = packed["latent"]
    out_lanes = packed["out_lanes"]
    h_last = conv_meta[-1]["h_out"]

    def kernel(x_ref, *rest):
        conv_refs = rest[:2 * n_conv]
        wh1_ref, bh1_ref, wh2_ref, bh2_ref, eps_ref, out_ref = rest[2 * n_conv:]

        # ---- conv blocks: 3 accumulating MXU matmuls per layer (M = B*H_out) ---
        prev = None
        for l in range(n_conv):
            h_out = conv_meta[l]["h_out"]
            w_ref = conv_refs[2 * l]
            b_ref = conv_refs[2 * l + 1]
            acc = None
            for kh in range(3):
                if l == 0:
                    lhs = x_ref[kh].reshape(h_out * b_blk, conv_meta[0]["l_in"])
                else:
                    pieces = []
                    for ch in plans[l][kh]:
                        if ch[0] == "zero":
                            pieces.append(jnp.zeros((ch[1] * b_blk, prev.shape[1]),
                                                    prev.dtype))
                        else:
                            _, start, length = ch
                            pieces.append(prev[start * b_blk:(start + length) * b_blk, :])
                    lhs = (pieces[0] if len(pieces) == 1
                           else jnp.concatenate(pieces, axis=0))
                t = jnp.dot(lhs.astype(jnp.bfloat16), w_ref[kh],
                            preferred_element_type=jnp.float32)
                acc = t if acc is None else acc + t
            prev = jnp.maximum(acc + b_ref[...], 0.0)            # (B*h_out, n_cols) f32

        # ---- flatten + FC heads as accumulating matmuls ------------------------
        y_bf = prev.astype(jnp.bfloat16)                         # (B*H_last, W*C)
        acc1 = None
        for hh in range(h_last):
            t = jnp.dot(y_bf[hh * b_blk:(hh + 1) * b_blk, :], wh1_ref[hh],
                        preferred_element_type=jnp.float32)
            acc1 = t if acc1 is None else acc1 + t
        s1 = acc1 + bh1_ref[...]                                  # (B, 2*hid)
        mulv = jnp.dot(s1.astype(jnp.bfloat16), wh2_ref[...],
                       preferred_element_type=jnp.float32) + bh2_ref[...]

        # ---- reparameterization + packed lane-dense output ---------------------
        mu = mulv[:, lat:2 * lat]
        logvar = mulv[:, 2 * lat:3 * lat]
        z = mu + eps_ref[...] * jnp.exp(0.5 * logvar)
        z_wide = jnp.concatenate(
            [z, jnp.zeros((b_blk, out_lanes - lat), jnp.float32)], axis=-1)
        out_ref[...] = mulv + z_wide                              # [z | mu | logvar | 0]

    return kernel


def contrastive_ve_forward(packed, x_nchw, eps, batch_block=None):
    """Forward pass.  x_nchw: (N, Cin, H, W) f32, eps: (N, latent) f32."""
    n = x_nchw.shape[0]
    lat = packed["latent"]
    out_lanes = packed["out_lanes"]
    b_blk = batch_block if batch_block is not None else _default_batch_block(n)
    n_blocks = -(-n // b_blk)
    n_pad = n_blocks * b_blk
    if n_pad != n:
        x_nchw = jnp.pad(x_nchw, ((0, n_pad - n), (0, 0), (0, 0), (0, 0)))
        eps = jnp.pad(eps, ((0, n_pad - n), (0, 0)))
    eps = eps.astype(jnp.float32)

    x_packed = pack_input(x_nchw, packed["conv_meta"], packed["orders0"])

    ops = []
    for w_, b_ in zip(packed["conv_w"], packed["conv_b"]):
        ops += [w_, b_]
    ops += [packed["wh1"], packed["bh1"], packed["wh2"], packed["bh2"]]

    in_specs = [pl.BlockSpec(
        (3, x_packed.shape[1], b_blk, x_packed.shape[3]),
        lambda i: (0, 0, i, 0))]
    in_specs += [pl.BlockSpec(op.shape, lambda i, nd=op.ndim: (0,) * nd) for op in ops]
    in_specs += [pl.BlockSpec((b_blk, lat), lambda i: (i, 0))]

    kernel = _make_kernel(packed, b_blk)
    out = pl.pallas_call(
        kernel,
        grid=(n_blocks,),
        in_specs=in_specs,
        out_specs=pl.BlockSpec((b_blk, out_lanes), lambda i: (i, 0)),
        out_shape=jax.ShapeDtypeStruct((n_pad, out_lanes), jnp.float32),
        compiler_params=pltpu.CompilerParams(
            dimension_semantics=("parallel",),          # 2 TCs on v7x; loop elsewhere
            vmem_limit_bytes=32 * 1024 * 1024),
    )(x_packed, *ops, eps)

    out = out[:n]
    return out[:, :lat], out[:, lat:2 * lat], out[:, 2 * lat:3 * lat]


# -----------------------------------------------------------------------------
# Pure-JAX reference (correctness check only)
# -----------------------------------------------------------------------------
def reference_forward(params, x_nchw, eps):
    h = x_nchw
    for w, b in params["conv"]:
        h = jax.lax.conv_general_dilated(
            h, w, window_strides=(2, 2), padding=((1, 1), (1, 1)),
            dimension_numbers=("NCHW", "OIHW", "NCHW"),
            precision=jax.lax.Precision.HIGHEST)
        h = jnp.maximum(h + b[None, :, None, None], 0.0)
    flat = h.reshape(h.shape[0], -1)

    def lin(x, w, b):
        return jnp.dot(x, w.T, precision=jax.lax.Precision.HIGHEST) + b

    mu = lin(lin(flat, params["z_mu_fc_w"], params["z_mu_fc_b"]),
             params["z_mu_w"], params["z_mu_b"])
    lv = lin(lin(flat, params["z_var_fc_w"], params["z_var_fc_b"]),
             params["z_var_w"], params["z_var_b"])
    z = mu + eps * jnp.exp(0.5 * lv)
    return z, mu, lv


# -----------------------------------------------------------------------------
if __name__ == "__main__":
    spatial_dims = 2
    in_channels = 1
    feature_size = 16            # input spatial size
    num_channels = (8, 16)
    latent_channels = 8
    batch = 16

    key = jax.random.PRNGKey(0)
    k_param, k_x, k_eps = jax.random.split(key, 3)

    params = init_params(k_param, in_channels, feature_size, num_channels,
                         latent_channels, spatial_dims)
    packed = pack_params(params, in_channels, feature_size, num_channels,
                         latent_channels, spatial_dims)

    x = jax.random.normal(k_x, (batch, in_channels, feature_size, feature_size),
                          jnp.float32)
    # torch.randn_like(std) reparameterization noise, supplied explicitly
    eps = jax.random.normal(k_eps, (batch, latent_channels), jnp.float32)

    fwd = jax.jit(functools.partial(contrastive_ve_forward, packed))
    z, z_mu, z_logvar = fwd(x, eps)
    jax.block_until_ready((z, z_mu, z_logvar))

    # sanity check against pure-JAX reference (HIGHEST precision); kernel matmuls
    # run bf16-operand / f32-accumulate on the MXU, hence the 2e-3 tolerance.
    z_r, mu_r, lv_r = reference_forward(params, x, eps)
    assert z.shape == (batch, latent_channels)
    assert z_mu.shape == (batch, latent_channels)
    assert z_logvar.shape == (batch, latent_channels)
    assert jnp.allclose(z_mu, mu_r, rtol=2e-3, atol=2e-3), \
        float(jnp.max(jnp.abs(z_mu - mu_r)))
    assert jnp.allclose(z_logvar, lv_r, rtol=2e-3, atol=2e-3), \
        float(jnp.max(jnp.abs(z_logvar - lv_r)))
    assert jnp.allclose(z, z_r, rtol=2e-3, atol=2e-3), \
        float(jnp.max(jnp.abs(z - z_r)))

    print("KERNEL_OK")
</pallas_src>

<mosaic_0001>
module attributes {stable_mosaic.version = 11 : i64} {
  func.func @kernel(%arg0: i32, %arg1: memref<3x8x8x18xf32, #tpu.memory_space<vmem>>, %arg2: memref<3x18x80xbf16, #tpu.memory_space<vmem>>, %arg3: memref<1x80xf32, #tpu.memory_space<vmem>>, %arg4: memref<3x80x64xbf16, #tpu.memory_space<vmem>>, %arg5: memref<1x64xf32, #tpu.memory_space<vmem>>, %arg6: memref<4x64x256xbf16, #tpu.memory_space<vmem>>, %arg7: memref<1x256xf32, #tpu.memory_space<vmem>>, %arg8: memref<256x128xbf16, #tpu.memory_space<vmem>>, %arg9: memref<1x128xf32, #tpu.memory_space<vmem>>, %arg10: memref<8x8xf32, #tpu.memory_space<vmem>>, %arg11: memref<8x128xf32, #tpu.memory_space<vmem>>) attributes {dimension_semantics = [#tpu.dimension_semantics<parallel>], iteration_bounds = array<i64: 2>, scalar_prefetch = 0 : i64, scratch_operands = 0 : i64, tpu.core_type = #tpu.core_type<tc>, window_params = [{transform_indices = @transform_0, window_bounds = array<i64: 3, 8, 8, 18>}, {pipeline_mode = #tpu.pipeline_mode<synchronous>, transform_indices = @transform_1, window_bounds = array<i64: 3, 18, 80>}, {pipeline_mode = #tpu.pipeline_mode<synchronous>, transform_indices = @transform_2, window_bounds = array<i64: 1, 80>}, {pipeline_mode = #tpu.pipeline_mode<synchronous>, transform_indices = @transform_3, window_bounds = array<i64: 3, 80, 64>}, {pipeline_mode = #tpu.pipeline_mode<synchronous>, transform_indices = @transform_4, window_bounds = array<i64: 1, 64>}, {pipeline_mode = #tpu.pipeline_mode<synchronous>, transform_indices = @transform_5, window_bounds = array<i64: 4, 64, 256>}, {pipeline_mode = #tpu.pipeline_mode<synchronous>, transform_indices = @transform_6, window_bounds = array<i64: 1, 256>}, {pipeline_mode = #tpu.pipeline_mode<synchronous>, transform_indices = @transform_7, window_bounds = array<i64: 256, 128>}, {pipeline_mode = #tpu.pipeline_mode<synchronous>, transform_indices = @transform_8, window_bounds = array<i64: 1, 128>}, {transform_indices = @transform_9, window_bounds = array<i64: 8, 8>}, {transform_indices = @transform_10, window_bounds = array<i64: 8, 128>}]} {
    %c0 = arith.constant 0 : index
    %c0_0 = arith.constant 0 : index
    %c0_1 = arith.constant 0 : index
    %c0_2 = arith.constant 0 : index
    %0 = vector.load %arg1[%c0, %c0_0, %c0_1, %c0_2] : memref<3x8x8x18xf32, #tpu.memory_space<vmem>>, vector<1x8x8x18xf32>
    %1 = vector.shape_cast %0 : vector<1x8x8x18xf32> to vector<8x8x18xf32>
    %2 = vector.shape_cast %1 : vector<8x8x18xf32> to vector<64x18xf32>
    %3 = arith.truncf %2 : vector<64x18xf32> to vector<64x18xbf16>
    %c0_3 = arith.constant 0 : index
    %c0_4 = arith.constant 0 : index
    %c0_5 = arith.constant 0 : index
    %4 = vector.load %arg2[%c0_3, %c0_4, %c0_5] : memref<3x18x80xbf16, #tpu.memory_space<vmem>>, vector<1x18x80xbf16>
    %5 = vector.shape_cast %4 : vector<1x18x80xbf16> to vector<18x80xbf16>
    %cst = arith.constant dense<0.000000e+00> : vector<64x80xf32>
    %6 = tpu.matmul %3, %5, %cst {dimension_numbers = #tpu.dot_dimension_numbers<[1], [0], [0], [1], [0, 0, 1, 1], [], []>} : vector<64x18xbf16>, vector<18x80xbf16>, vector<64x80xf32> -> vector<64x80xf32>
    %c1 = arith.constant 1 : index
    %c0_6 = arith.constant 0 : index
    %c0_7 = arith.constant 0 : index
    %c0_8 = arith.constant 0 : index
    %7 = vector.load %arg1[%c1, %c0_6, %c0_7, %c0_8] : memref<3x8x8x18xf32, #tpu.memory_space<vmem>>, vector<1x8x8x18xf32>
    %8 = vector.shape_cast %7 : vector<1x8x8x18xf32> to vector<8x8x18xf32>
    %9 = vector.shape_cast %8 : vector<8x8x18xf32> to vector<64x18xf32>
    %10 = arith.truncf %9 : vector<64x18xf32> to vector<64x18xbf16>
    %c1_9 = arith.constant 1 : index
    %c0_10 = arith.constant 0 : index
    %c0_11 = arith.constant 0 : index
    %11 = vector.load %arg2[%c1_9, %c0_10, %c0_11] : memref<3x18x80xbf16, #tpu.memory_space<vmem>>, vector<1x18x80xbf16>
    %12 = vector.shape_cast %11 : vector<1x18x80xbf16> to vector<18x80xbf16>
    %cst_12 = arith.constant dense<0.000000e+00> : vector<64x80xf32>
    %13 = tpu.matmul %10, %12, %cst_12 {dimension_numbers = #tpu.dot_dimension_numbers<[1], [0], [0], [1], [0, 0, 1, 1], [], []>} : vector<64x18xbf16>, vector<18x80xbf16>, vector<64x80xf32> -> vector<64x80xf32>
    %14 = arith.addf %6, %13 : vector<64x80xf32>
    %c2 = arith.constant 2 : index
    %c0_13 = arith.constant 0 : index
    %c0_14 = arith.constant 0 : index
    %c0_15 = arith.constant 0 : index
    %15 = vector.load %arg1[%c2, %c0_13, %c0_14, %c0_15] : memref<3x8x8x18xf32, #tpu.memory_space<vmem>>, vector<1x8x8x18xf32>
    %16 = vector.shape_cast %15 : vector<1x8x8x18xf32> to vector<8x8x18xf32>
    %17 = vector.shape_cast %16 : vector<8x8x18xf32> to vector<64x18xf32>
    %18 = arith.truncf %17 : vector<64x18xf32> to vector<64x18xbf16>
    %c2_16 = arith.constant 2 : index
    %c0_17 = arith.constant 0 : index
    %c0_18 = arith.constant 0 : index
    %19 = vector.load %arg2[%c2_16, %c0_17, %c0_18] : memref<3x18x80xbf16, #tpu.memory_space<vmem>>, vector<1x18x80xbf16>
    %20 = vector.shape_cast %19 : vector<1x18x80xbf16> to vector<18x80xbf16>
    %cst_19 = arith.constant dense<0.000000e+00> : vector<64x80xf32>
    %21 = tpu.matmul %18, %20, %cst_19 {dimension_numbers = #tpu.dot_dimension_numbers<[1], [0], [0], [1], [0, 0, 1, 1], [], []>} : vector<64x18xbf16>, vector<18x80xbf16>, vector<64x80xf32> -> vector<64x80xf32>
    %22 = arith.addf %14, %21 : vector<64x80xf32>
    %c0_20 = arith.constant 0 : index
    %c0_21 = arith.constant 0 : index
    %23 = vector.load %arg3[%c0_20, %c0_21] : memref<1x80xf32, #tpu.memory_space<vmem>>, vector<1x80xf32>
    %24 = vector.broadcast %23 : vector<1x80xf32> to vector<64x80xf32>
    %25 = arith.addf %22, %24 : vector<64x80xf32>
    %cst_22 = arith.constant 0.000000e+00 : f32
    %26 = vector.broadcast %cst_22 : f32 to vector<64x80xf32>
    %27 = arith.maximumf %25, %26 : vector<64x80xf32>
    %cst_23 = arith.constant 0.000000e+00 : f32
    %28 = vector.broadcast %cst_23 : f32 to vector<8x80xf32>
    %29 = vector.extract_strided_slice %27 {offsets = [32, 0], sizes = [24, 80], strides = [1, 1]} : vector<64x80xf32> to vector<24x80xf32>
    %30 = tpu.concatenate %28, %29 in 0 : vector<8x80xf32>, vector<24x80xf32> -> vector<32x80xf32>
    %31 = arith.truncf %30 : vector<32x80xf32> to vector<32x80xbf16>
    %c0_24 = arith.constant 0 : index
    %c0_25 = arith.constant 0 : index
    %c0_26 = arith.constant 0 : index
    %32 = vector.load %arg4[%c0_24, %c0_25, %c0_26] : memref<3x80x64xbf16, #tpu.memory_space<vmem>>, vector<1x80x64xbf16>
    %33 = vector.shape_cast %32 : vector<1x80x64xbf16> to vector<80x64xbf16>
    %cst_27 = arith.constant dense<0.000000e+00> : vector<32x64xf32>
    %34 = tpu.matmul %31, %33, %cst_27 {dimension_numbers = #tpu.dot_dimension_numbers<[1], [0], [0], [1], [0, 0, 1, 1], [], []>} : vector<32x80xbf16>, vector<80x64xbf16>, vector<32x64xf32> -> vector<32x64xf32>
    %35 = vector.extract_strided_slice %27 {offsets = [0, 0], sizes = [32, 80], strides = [1, 1]} : vector<64x80xf32> to vector<32x80xf32>
    %36 = arith.truncf %35 : vector<32x80xf32> to vector<32x80xbf16>
    %c1_28 = arith.constant 1 : index
    %c0_29 = arith.constant 0 : index
    %c0_30 = arith.constant 0 : index
    %37 = vector.load %arg4[%c1_28, %c0_29, %c0_30] : memref<3x80x64xbf16, #tpu.memory_space<vmem>>, vector<1x80x64xbf16>
    %38 = vector.shape_cast %37 : vector<1x80x64xbf16> to vector<80x64xbf16>
    %cst_31 = arith.constant dense<0.000000e+00> : vector<32x64xf32>
    %39 = tpu.matmul %36, %38, %cst_31 {dimension_numbers = #tpu.dot_dimension_numbers<[1], [0], [0], [1], [0, 0, 1, 1], [], []>} : vector<32x80xbf16>, vector<80x64xbf16>, vector<32x64xf32> -> vector<32x64xf32>
    %40 = arith.addf %34, %39 : vector<32x64xf32>
    %41 = vector.extract_strided_slice %27 {offsets = [32, 0], sizes = [32, 80], strides = [1, 1]} : vector<64x80xf32> to vector<32x80xf32>
    %42 = arith.truncf %41 : vector<32x80xf32> to vector<32x80xbf16>
    %c2_32 = arith.constant 2 : index
    %c0_33 = arith.constant 0 : index
    %c0_34 = arith.constant 0 : index
    %43 = vector.load %arg4[%c2_32, %c0_33, %c0_34] : memref<3x80x64xbf16, #tpu.memory_space<vmem>>, vector<1x80x64xbf16>
    %44 = vector.shape_cast %43 : vector<1x80x64xbf16> to vector<80x64xbf16>
    %cst_35 = arith.constant dense<0.000000e+00> : vector<32x64xf32>
    %45 = tpu.matmul %42, %44, %cst_35 {dimension_numbers = #tpu.dot_dimension_numbers<[1], [0], [0], [1], [0, 0, 1, 1], [], []>} : vector<32x80xbf16>, vector<80x64xbf16>, vector<32x64xf32> -> vector<32x64xf32>
    %46 = arith.addf %40, %45 : vector<32x64xf32>
    %c0_36 = arith.constant 0 : index
    %c0_37 = arith.constant 0 : index
    %47 = vector.load %arg5[%c0_36, %c0_37] : memref<1x64xf32, #tpu.memory_space<vmem>>, vector<1x64xf32>
    %48 = vector.broadcast %47 : vector<1x64xf32> to vector<32x64xf32>
    %49 = arith.addf %46, %48 : vector<32x64xf32>
    %cst_38 = arith.constant 0.000000e+00 : f32
    %50 = vector.broadcast %cst_38 : f32 to vector<32x64xf32>
    %51 = arith.maximumf %49, %50 : vector<32x64xf32>
    %52 = arith.truncf %51 : vector<32x64xf32> to vector<32x64xbf16>
    %53 = vector.extract_strided_slice %52 {offsets = [0, 0], sizes = [8, 64], strides = [1, 1]} : vector<32x64xbf16> to vector<8x64xbf16>
    %c0_39 = arith.constant 0 : index
    %c0_40 = arith.constant 0 : index
    %c0_41 = arith.constant 0 : index
    %54 = vector.load %arg6[%c0_39, %c0_40, %c0_41] : memref<4x64x256xbf16, #tpu.memory_space<vmem>>, vector<1x64x256xbf16>
    %55 = vector.shape_cast %54 : vector<1x64x256xbf16> to vector<64x256xbf16>
    %cst_42 = arith.constant dense<0.000000e+00> : vector<8x256xf32>
    %56 = tpu.matmul %53, %55, %cst_42 {dimension_numbers = #tpu.dot_dimension_numbers<[1], [0], [0], [1], [0, 0, 1, 1], [], []>} : vector<8x64xbf16>, vector<64x256xbf16>, vector<8x256xf32> -> vector<8x256xf32>
    %57 = vector.extract_strided_slice %52 {offsets = [8, 0], sizes = [8, 64], strides = [1, 1]} : vector<32x64xbf16> to vector<8x64xbf16>
    %c1_43 = arith.constant 1 : index
    %c0_44 = arith.constant 0 : index
    %c0_45 = arith.constant 0 : index
    %58 = vector.load %arg6[%c1_43, %c0_44, %c0_45] : memref<4x64x256xbf16, #tpu.memory_space<vmem>>, vector<1x64x256xbf16>
    %59 = vector.shape_cast %58 : vector<1x64x256xbf16> to vector<64x256xbf16>
    %cst_46 = arith.constant dense<0.000000e+00> : vector<8x256xf32>
    %60 = tpu.matmul %57, %59, %cst_46 {dimension_numbers = #tpu.dot_dimension_numbers<[1], [0], [0], [1], [0, 0, 1, 1], [], []>} : vector<8x64xbf16>, vector<64x256xbf16>, vector<8x256xf32> -> vector<8x256xf32>
    %61 = arith.addf %56, %60 : vector<8x256xf32>
    %62 = vector.extract_strided_slice %52 {offsets = [16, 0], sizes = [8, 64], strides = [1, 1]} : vector<32x64xbf16> to vector<8x64xbf16>
    %c2_47 = arith.constant 2 : index
    %c0_48 = arith.constant 0 : index
    %c0_49 = arith.constant 0 : index
    %63 = vector.load %arg6[%c2_47, %c0_48, %c0_49] : memref<4x64x256xbf16, #tpu.memory_space<vmem>>, vector<1x64x256xbf16>
    %64 = vector.shape_cast %63 : vector<1x64x256xbf16> to vector<64x256xbf16>
    %cst_50 = arith.constant dense<0.000000e+00> : vector<8x256xf32>
    %65 = tpu.matmul %62, %64, %cst_50 {dimension_numbers = #tpu.dot_dimension_numbers<[1], [0], [0], [1], [0, 0, 1, 1], [], []>} : vector<8x64xbf16>, vector<64x256xbf16>, vector<8x256xf32> -> vector<8x256xf32>
    %66 = arith.addf %61, %65 : vector<8x256xf32>
    %67 = vector.extract_strided_slice %52 {offsets = [24, 0], sizes = [8, 64], strides = [1, 1]} : vector<32x64xbf16> to vector<8x64xbf16>
    %c3 = arith.constant 3 : index
    %c0_51 = arith.constant 0 : index
    %c0_52 = arith.constant 0 : index
    %68 = vector.load %arg6[%c3, %c0_51, %c0_52] : memref<4x64x256xbf16, #tpu.memory_space<vmem>>, vector<1x64x256xbf16>
    %69 = vector.shape_cast %68 : vector<1x64x256xbf16> to vector<64x256xbf16>
    %cst_53 = arith.constant dense<0.000000e+00> : vector<8x256xf32>
    %70 = tpu.matmul %67, %69, %cst_53 {dimension_numbers = #tpu.dot_dimension_numbers<[1], [0], [0], [1], [0, 0, 1, 1], [], []>} : vector<8x64xbf16>, vector<64x256xbf16>, vector<8x256xf32> -> vector<8x256xf32>
    %71 = arith.addf %66, %70 : vector<8x256xf32>
    %c0_54 = arith.constant 0 : index
    %c0_55 = arith.constant 0 : index
    %72 = vector.load %arg7[%c0_54, %c0_55] : memref<1x256xf32, #tpu.memory_space<vmem>>, vector<1x256xf32>
    %73 = vector.broadcast %72 : vector<1x256xf32> to vector<8x256xf32>
    %74 = arith.addf %71, %73 : vector<8x256xf32>
    %75 = arith.truncf %74 : vector<8x256xf32> to vector<8x256xbf16>
    %c0_56 = arith.constant 0 : index
    %c0_57 = arith.constant 0 : index
    %76 = vector.load %arg8[%c0_56, %c0_57] : memref<256x128xbf16, #tpu.memory_space<vmem>>, vector<256x128xbf16>
    %cst_58 = arith.constant dense<0.000000e+00> : vector<8x128xf32>
    %77 = tpu.matmul %75, %76, %cst_58 {dimension_numbers = #tpu.dot_dimension_numbers<[1], [0], [0], [1], [0, 0, 1, 1], [], []>} : vector<8x256xbf16>, vector<256x128xbf16>, vector<8x128xf32> -> vector<8x128xf32>
    %c0_59 = arith.constant 0 : index
    %c0_60 = arith.constant 0 : index
    %78 = vector.load %arg9[%c0_59, %c0_60] : memref<1x128xf32, #tpu.memory_space<vmem>>, vector<1x128xf32>
    %79 = vector.broadcast %78 : vector<1x128xf32> to vector<8x128xf32>
    %80 = arith.addf %77, %79 : vector<8x128xf32>
    %81 = vector.extract_strided_slice %80 {offsets = [0, 8], sizes = [8, 8], strides = [1, 1]} : vector<8x128xf32> to vector<8x8xf32>
    %82 = vector.extract_strided_slice %80 {offsets = [0, 16], sizes = [8, 8], strides = [1, 1]} : vector<8x128xf32> to vector<8x8xf32>
    %c0_61 = arith.constant 0 : index
    %c0_62 = arith.constant 0 : index
    %83 = vector.load %arg10[%c0_61, %c0_62] : memref<8x8xf32, #tpu.memory_space<vmem>>, vector<8x8xf32>
    %cst_63 = arith.constant 5.000000e-01 : f32
    %84 = vector.broadcast %cst_63 : f32 to vector<8x8xf32>
    %85 = arith.mulf %84, %82 : vector<8x8xf32>
    %86 = math.exp %85 : vector<8x8xf32>
    %87 = arith.mulf %83, %86 : vector<8x8xf32>
    %88 = arith.addf %81, %87 : vector<8x8xf32>
    %cst_64 = arith.constant 0.000000e+00 : f32
    %89 = vector.broadcast %cst_64 : f32 to vector<8x120xf32>
    %90 = tpu.concatenate %88, %89 in 1 : vector<8x8xf32>, vector<8x120xf32> -> vector<8x128xf32>
    %91 = arith.addf %80, %90 : vector<8x128xf32>
    %c0_65 = arith.constant 0 : index
    %c0_66 = arith.constant 0 : index
    %92 = vector.load %arg11[%c0_65, %c0_66] : memref<8x128xf32, #tpu.memory_space<vmem>>, vector<8x128xf32>
    tpu.vector_store %arg11[%c0_65, %c0_66], %91 {strides = array<i32>} : memref<8x128xf32, #tpu.memory_space<vmem>>, vector<8x128xf32>,
    return
  }
  func.func @transform_0(%arg0: i32) -> (i32, i32, i32, i32) {
    %c0_i32 = arith.constant 0 : i32
    %c0_i32_0 = arith.constant 0 : i32
    %c0_i32_1 = arith.constant 0 : i32
    %c0_i32_2 = arith.constant 0 : i32
    return %c0_i32, %c0_i32_0, %arg0, %c0_i32_1 : i32, i32, i32, i32
  }
  func.func @transform_1(%arg0: i32) -> (i32, i32, i32) {
    %c0_i32 = arith.constant 0 : i32
    %c0_i32_0 = arith.constant 0 : i32
    %c0_i32_1 = arith.constant 0 : i32
    %c0_i32_2 = arith.constant 0 : i32
    return %c0_i32, %c0_i32_0, %c0_i32_1 : i32, i32, i32
  }
  func.func @transform_2(%arg0: i32) -> (i32, i32) {
    %c0_i32 = arith.constant 0 : i32
    %c0_i32_0 = arith.constant 0 : i32
    %c0_i32_1 = arith.constant 0 : i32
    return %c0_i32, %c0_i32_0 : i32, i32
  }
  func.func @transform_3(%arg0: i32) -> (i32, i32, i32) {
    %c0_i32 = arith.constant 0 : i32
    %c0_i32_0 = arith.constant 0 : i32
    %c0_i32_1 = arith.constant 0 : i32
    %c0_i32_2 = arith.constant 0 : i32
    return %c0_i32, %c0_i32_0, %c0_i32_1 : i32, i32, i32
  }
  func.func @transform_4(%arg0: i32) -> (i32, i32) {
    %c0_i32 = arith.constant 0 : i32
    %c0_i32_0 = arith.constant 0 : i32
    %c0_i32_1 = arith.constant 0 : i32
    return %c0_i32, %c0_i32_0 : i32, i32
  }
  func.func @transform_5(%arg0: i32) -> (i32, i32, i32) {
    %c0_i32 = arith.constant 0 : i32
    %c0_i32_0 = arith.constant 0 : i32
    %c0_i32_1 = arith.constant 0 : i32
    %c0_i32_2 = arith.constant 0 : i32
    return %c0_i32, %c0_i32_0, %c0_i32_1 : i32, i32, i32
  }
  func.func @transform_6(%arg0: i32) -> (i32, i32) {
    %c0_i32 = arith.constant 0 : i32
    %c0_i32_0 = arith.constant 0 : i32
    %c0_i32_1 = arith.constant 0 : i32
    return %c0_i32, %c0_i32_0 : i32, i32
  }
  func.func @transform_7(%arg0: i32) -> (i32, i32) {
    %c0_i32 = arith.constant 0 : i32
    %c0_i32_0 = arith.constant 0 : i32
    %c0_i32_1 = arith.constant 0 : i32
    return %c0_i32, %c0_i32_0 : i32, i32
  }
  func.func @transform_8(%arg0: i32) -> (i32, i32) {
    %c0_i32 = arith.constant 0 : i32
    %c0_i32_0 = arith.constant 0 : i32
    %c0_i32_1 = arith.constant 0 : i32
    return %c0_i32, %c0_i32_0 : i32, i32
  }
  func.func @transform_9(%arg0: i32) -> (i32, i32) {
    %c0_i32 = arith.constant 0 : i32
    %c0_i32_0 = arith.constant 0 : i32
    return %arg0, %c0_i32 : i32, i32
  }
  func.func @transform_10(%arg0: i32) -> (i32, i32) {
    %c0_i32 = arith.constant 0 : i32
    %c0_i32_0 = arith.constant 0 : i32
    return %arg0, %c0_i32 : i32, i32
  }
}

</mosaic_0001>

<llo_original>
// kernel: contrastive_ve_forward.1
$region0: #{contrastive_ve_forward.1}
  #allocation0 [shape = 'u32[]', space=smem, size = 0x4, offset = 0x4, fixed_abs, tag = 'smem constant byte address 0x4 - core index']
  #allocation1 [shape = 'u32[72,128]{1,0:T(1,128)}', space=vmem, size = 0x9000, scoped, tag = 'internal scratch']
  %s0 = inlined_call_operand.vmem [shape: f32[3,8,16,18], index: 0, kind: input, shape index: {}]
  %s1 = inlined_call_operand.vmem [shape: bf16[3,18,80], index: 1, kind: input, shape index: {}]
  %s2 = inlined_call_operand.vmem [shape: f32[1,80], index: 2, kind: input, shape index: {}]
  %s3 = inlined_call_operand.vmem [shape: bf16[3,80,64], index: 3, kind: input, shape index: {}]
  %s4 = inlined_call_operand.vmem [shape: f32[1,64], index: 4, kind: input, shape index: {}]
  %s5 = inlined_call_operand.vmem [shape: bf16[4,64,256], index: 5, kind: input, shape index: {}]
  %s6 = inlined_call_operand.vmem [shape: f32[1,256], index: 6, kind: input, shape index: {}]
  %s7 = inlined_call_operand.vmem [shape: bf16[256,128], index: 7, kind: input, shape index: {}]
  %s8 = inlined_call_operand.vmem [shape: f32[1,128], index: 8, kind: input, shape index: {}]
  %s9 = inlined_call_operand.vmem [shape: f32[16,8], index: 9, kind: input, shape index: {}]
  %s10 = inlined_call_operand.vmem [shape: f32[16,128], index: 10, kind: output, shape index: {}]
  %s11 = sld [smem:[#allocation0]]
  $region111: #{contrastive_ve_forward.1} parent=0
    _
  %s13 = ssub.s32 1, %s11
  %s14 = scalar_select 0, %s13, %s11
  $region1: #{contrastive_ve_forward.1} parent=0
    #allocation2 [shape = 'u8[196608]{0}', space=vmem, size = 0x30000, scoped, tag = 'input window, operand 0']
    loop: start=0, step=1, limit=4
    $region2: #{contrastive_ve_forward.1} parent=1 // loop_pre_header
      _
    $region3: #{contrastive_ve_forward.1} parent=1 // loop_header
      %s16 = sphi 0, %s20
      %p17 = scmp.ge.s32.totalorder %s16, 4
      %s26 = sphi 0, %s28
      %s29 = sphi 0, %s26
      %s30 = sphi 0, %s29
      %s46 = sphi 0, %s30
      %s50 = sphi 0, %s50
      %s52 = sphi 0, %s50
      %s53 = sphi 0, %s52
      %s67 = sphi 0, %s53
      %s71 = sphi 0, %s71
      %s73 = sphi 0, %s71
      %s74 = sphi 0, %s73
      %s88 = sphi 0, %s74
      %s92 = sphi 0, %s92
      %s94 = sphi 0, %s92
      %s95 = sphi 0, %s94
      %s109 = sphi 0, %s95
      %s113 = sphi 0, %s113
      %s115 = sphi 0, %s113
      %s116 = sphi 0, %s115
      %s130 = sphi 0, %s116
      %s134 = sphi 0, %s134
      %s136 = sphi 0, %s134
      %s137 = sphi 0, %s136
      %s151 = sphi 0, %s137
      %s155 = sphi 0, %s155
      %s157 = sphi 0, %s155
      %s158 = sphi 0, %s157
      %s172 = sphi 0, %s158
      %s176 = sphi 0, %s176
      %s178 = sphi 0, %s176
      %s179 = sphi 0, %s178
      %s193 = sphi 0, %s179
      %s197 = sphi 0, %s197
      %s199 = sphi 0, %s197
      %s200 = sphi 0, %s199
      %s214 = sphi 0, %s200
      %s220 = sphi 0, %s222
      %s223 = sphi 0, %s220
      %s224 = sphi 0, %s223
      %s240 = sphi 0, %s224
      %s246 = sphi 0, %s248
      %s249 = sphi 0, %s246
      %s250 = sphi 0, %s249
      %s266 = sphi 0, %s250
    $region4: #{contrastive_ve_forward.1} parent=1 // loop_header_branch
      %19 = sbr.rel (%p17) target = $region8
    $region5: #{contrastive_ve_forward.1} parent=1 // loop_body
      %s21 = ssub.s32 %s16, 1
      %s22 = ssub.s32 %s16, 2
      %s23 = sadd.s32 %s16, 1
      %s24 = ssub.s32 %s16, %s23
      %p25 = scmp.eq.s32.totalorder %s24, 0
      %s27 = sadd.s32 %s26, 1
      %s28 = scalar_select %p25, %s26, %s27
      %p31 = pneg %p25
      %p32 = scmp.eq.s32.totalorder %s16, 1
      %p33 = por %p31, %p32
      %p34 = scmp.ne.s32.totalorder %s26, %s29
      %p35 = scmp.eq.s32.totalorder %s16, 0
      %p36 = por %p34, %p35
      %p37 = scmp.ne.s32.totalorder %s26, %s29
      %p38 = scmp.eq.s32.totalorder %s21, 1
      %p39 = por %p37, %p38
      %p40 = scmp.ne.s32.totalorder %s29, %s30
      %p41 = scmp.eq.s32.totalorder %s21, 0
      %p42 = por %p40, %p41
      %p43 = scmp.ne.s32.totalorder %s29, %s30
      %p44 = scmp.eq.s32.totalorder %s22, 1
      %p45 = por %p43, %p44
      %p47 = scmp.ne.s32.totalorder %s30, %s46
      %p48 = scmp.eq.s32.totalorder %s22, 0
      %p49 = por %p47, %p48
      %s51 = sadd.s32 %s50, 1
      %p54 = scmp.eq.s32.totalorder %s16, 1
      %p55 = scmp.ne.s32.totalorder %s50, %s52
      %p56 = scmp.eq.s32.totalorder %s16, 0
      %p57 = por %p55, %p56
      %p58 = scmp.ne.s32.totalorder %s50, %s52
      %p59 = scmp.eq.s32.totalorder %s21, 1
      %p60 = por %p58, %p59
      %p61 = scmp.ne.s32.totalorder %s52, %s53
      %p62 = scmp.eq.s32.totalorder %s21, 0
      %p63 = por %p61, %p62
      %p64 = scmp.ne.s32.totalorder %s52, %s53
      %p65 = scmp.eq.s32.totalorder %s22, 1
      %p66 = por %p64, %p65
      %p68 = scmp.ne.s32.totalorder %s53, %s67
      %p69 = scmp.eq.s32.totalorder %s22, 0
      %p70 = por %p68, %p69
      %s72 = sadd.s32 %s71, 1
      %p75 = scmp.eq.s32.totalorder %s16, 1
      %p76 = scmp.ne.s32.totalorder %s71, %s73
      %p77 = scmp.eq.s32.totalorder %s16, 0
      %p78 = por %p76, %p77
      %p79 = scmp.ne.s32.totalorder %s71, %s73
      %p80 = scmp.eq.s32.totalorder %s21, 1
      %p81 = por %p79, %p80
      %p82 = scmp.ne.s32.totalorder %s73, %s74
      %p83 = scmp.eq.s32.totalorder %s21, 0
      %p84 = por %p82, %p83
      %p85 = scmp.ne.s32.totalorder %s73, %s74
      %p86 = scmp.eq.s32.totalorder %s22, 1
      %p87 = por %p85, %p86
      %p89 = scmp.ne.s32.totalorder %s74, %s88
      %p90 = scmp.eq.s32.totalorder %s22, 0
      %p91 = por %p89, %p90
      %s93 = sadd.s32 %s92, 1
      %p96 = scmp.eq.s32.totalorder %s16, 1
      %p97 = scmp.ne.s32.totalorder %s92, %s94
      %p98 = scmp.eq.s32.totalorder %s16, 0
      %p99 = por %p97, %p98
      %p100 = scmp.ne.s32.totalorder %s92, %s94
      %p101 = scmp.eq.s32.totalorder %s21, 1
      %p102 = por %p100, %p101
      %p103 = scmp.ne.s32.totalorder %s94, %s95
      %p104 = scmp.eq.s32.totalorder %s21, 0
      %p105 = por %p103, %p104
      %p106 = scmp.ne.s32.totalorder %s94, %s95
      %p107 = scmp.eq.s32.totalorder %s22, 1
      %p108 = por %p106, %p107
      %p110 = scmp.ne.s32.totalorder %s95, %s109
      %p111 = scmp.eq.s32.totalorder %s22, 0
      %p112 = por %p110, %p111
      %s114 = sadd.s32 %s113, 1
      %p117 = scmp.eq.s32.totalorder %s16, 1
      %p118 = scmp.ne.s32.totalorder %s113, %s115
      %p119 = scmp.eq.s32.totalorder %s16, 0
      %p120 = por %p118, %p119
      %p121 = scmp.ne.s32.totalorder %s113, %s115
      %p122 = scmp.eq.s32.totalorder %s21, 1
      %p123 = por %p121, %p122
      %p124 = scmp.ne.s32.totalorder %s115, %s116
      %p125 = scmp.eq.s32.totalorder %s21, 0
      %p126 = por %p124, %p125
      %p127 = scmp.ne.s32.totalorder %s115, %s116
      %p128 = scmp.eq.s32.totalorder %s22, 1
      %p129 = por %p127, %p128
      %p131 = scmp.ne.s32.totalorder %s116, %s130
      %p132 = scmp.eq.s32.totalorder %s22, 0
      %p133 = por %p131, %p132
      %s135 = sadd.s32 %s134, 1
      %p138 = scmp.eq.s32.totalorder %s16, 1
      %p139 = scmp.ne.s32.totalorder %s134, %s136
      %p140 = scmp.eq.s32.totalorder %s16, 0
      %p141 = por %p139, %p140
      %p142 = scmp.ne.s32.totalorder %s134, %s136
      %p143 = scmp.eq.s32.totalorder %s21, 1
      %p144 = por %p142, %p143
      %p145 = scmp.ne.s32.totalorder %s136, %s137
      %p146 = scmp.eq.s32.totalorder %s21, 0
      %p147 = por %p145, %p146
      %p148 = scmp.ne.s32.totalorder %s136, %s137
      %p149 = scmp.eq.s32.totalorder %s22, 1
      %p150 = por %p148, %p149
      %p152 = scmp.ne.s32.totalorder %s137, %s151
      %p153 = scmp.eq.s32.totalorder %s22, 0
      %p154 = por %p152, %p153
      %s156 = sadd.s32 %s155, 1
      %p159 = scmp.eq.s32.totalorder %s16, 1
      %p160 = scmp.ne.s32.totalorder %s155, %s157
      %p161 = scmp.eq.s32.totalorder %s16, 0
      %p162 = por %p160, %p161
      %p163 = scmp.ne.s32.totalorder %s155, %s157
      %p164 = scmp.eq.s32.totalorder %s21, 1
      %p165 = por %p163, %p164
      %p166 = scmp.ne.s32.totalorder %s157, %s158
      %p167 = scmp.eq.s32.totalorder %s21, 0
      %p168 = por %p166, %p167
      %p169 = scmp.ne.s32.totalorder %s157, %s158
      %p170 = scmp.eq.s32.totalorder %s22, 1
      %p171 = por %p169, %p170
      %p173 = scmp.ne.s32.totalorder %s158, %s172
      %p174 = scmp.eq.s32.totalorder %s22, 0
      %p175 = por %p173, %p174
      %s177 = sadd.s32 %s176, 1
      %p180 = scmp.eq.s32.totalorder %s16, 1
      %p181 = scmp.ne.s32.totalorder %s176, %s178
      %p182 = scmp.eq.s32.totalorder %s16, 0
      %p183 = por %p181, %p182
      %p184 = scmp.ne.s32.totalorder %s176, %s178
      %p185 = scmp.eq.s32.totalorder %s21, 1
      %p186 = por %p184, %p185
      %p187 = scmp.ne.s32.totalorder %s178, %s179
      %p188 = scmp.eq.s32.totalorder %s21, 0
      %p189 = por %p187, %p188
      %p190 = scmp.ne.s32.totalorder %s178, %s179
      %p191 = scmp.eq.s32.totalorder %s22, 1
      %p192 = por %p190, %p191
      %p194 = scmp.ne.s32.totalorder %s179, %s193
      %p195 = scmp.eq.s32.totalorder %s22, 0
      %p196 = por %p194, %p195
      %s198 = sadd.s32 %s197, 1
      %p201 = scmp.eq.s32.totalorder %s16, 1
      %p202 = scmp.ne.s32.totalorder %s197, %s199
      %p203 = scmp.eq.s32.totalorder %s16, 0
      %p204 = por %p202, %p203
      %p205 = scmp.ne.s32.totalorder %s197, %s199
      %p206 = scmp.eq.s32.totalorder %s21, 1
      %p207 = por %p205, %p206
      %p208 = scmp.ne.s32.totalorder %s199, %s200
      %p209 = scmp.eq.s32.totalorder %s21, 0
      %p210 = por %p208, %p209
      %p211 = scmp.ne.s32.totalorder %s199, %s200
      %p212 = scmp.eq.s32.totalorder %s22, 1
      %p213 = por %p211, %p212
      %p215 = scmp.ne.s32.totalorder %s200, %s214
      %p216 = scmp.eq.s32.totalorder %s22, 0
      %p217 = por %p215, %p216
      %s218 = ssub.s32 %s16, %s23
      %p219 = scmp.eq.s32.totalorder %s218, 0
      %s221 = sadd.s32 %s220, 1
      %s222 = scalar_select %p219, %s220, %s221
      %p225 = pneg %p219
      %p226 = scmp.eq.s32.totalorder %s16, 1
      %p227 = por %p225, %p226
      %p228 = scmp.ne.s32.totalorder %s220, %s223
      %p229 = scmp.eq.s32.totalorder %s16, 0
      %p230 = por %p228, %p229
      %p231 = scmp.ne.s32.totalorder %s220, %s223
      %p232 = scmp.eq.s32.totalorder %s21, 1
      %p233 = por %p231, %p232
      %p234 = scmp.ne.s32.totalorder %s223, %s224
      %p235 = scmp.eq.s32.totalorder %s21, 0
      %p236 = por %p234, %p235
      %p237 = scmp.ne.s32.totalorder %s223, %s224
      %p238 = scmp.eq.s32.totalorder %s22, 1
      %p239 = por %p237, %p238
      %p241 = scmp.ne.s32.totalorder %s224, %s240
      %p242 = scmp.eq.s32.totalorder %s22, 0
      %p243 = por %p241, %p242
      %s244 = ssub.s32 %s16, %s23
      %p245 = scmp.eq.s32.totalorder %s244, 0
      %s247 = sadd.s32 %s246, 1
      %s248 = scalar_select %p245, %s246, %s247
      %p251 = pneg %p245
      %p252 = scmp.eq.s32.totalorder %s16, 1
      %p253 = por %p251, %p252
      %p254 = scmp.ne.s32.totalorder %s246, %s249
      %p255 = scmp.eq.s32.totalorder %s16, 0
      %p256 = por %p254, %p255
      %p257 = scmp.ne.s32.totalorder %s246, %s249
      %p258 = scmp.eq.s32.totalorder %s21, 1
      %p259 = por %p257, %p258
      %p260 = scmp.ne.s32.totalorder %s249, %s250
      %p261 = scmp.eq.s32.totalorder %s21, 0
      %p262 = por %p260, %p261
      %p263 = scmp.ne.s32.totalorder %s249, %s250
      %p264 = scmp.eq.s32.totalorder %s22, 1
      %p265 = por %p263, %p264
      %p267 = scmp.ne.s32.totalorder %s250, %s266
      %p268 = scmp.eq.s32.totalorder %s22, 0
      %p269 = por %p267, %p268
      %p270 = scmp.le.s32.totalorder 1, %s16
      %p271 = scmp.lt.s32.totalorder %s16, 3
      %p272 = pnand %p270, %p271
      %p273 = pneg %p272
      // Predicated region
      $region9: #{contrastive_ve_forward.1} parent=5 // pred_check
        _
      $region10: #{contrastive_ve_forward.1} parent=5 // pred_check_branch
        %275 = sbr.rel (%p272) target = $region12
      $region11: #{contrastive_ve_forward.1} parent=5 // pred_region
        %s276 = ssub.s32 %s16, 1
        // Predicated region
        $region13: #{contrastive_ve_forward.1} parent=11 // pred_check
          %p277 = pneg %p63
        $region14: #{contrastive_ve_forward.1} parent=11 // pred_check_branch
          %279 = sbr.rel (%p277) target = $region16
        $region15: #{contrastive_ve_forward.1} parent=11 // pred_region
          _
        $region16: #{contrastive_ve_forward.1} parent=11 // pred_fallthru
          _
        // Predicated region
        $region17: #{contrastive_ve_forward.1} parent=11 // pred_check
          %p280 = pneg %p84
        $region18: #{contrastive_ve_forward.1} parent=11 // pred_check_branch
          %282 = sbr.rel (%p280) target = $region20
        $region19: #{contrastive_ve_forward.1} parent=11 // pred_region
          _
        $region20: #{contrastive_ve_forward.1} parent=11 // pred_fallthru
          _
        // Predicated region
        $region21: #{contrastive_ve_forward.1} parent=11 // pred_check
          %p283 = pneg %p105
        $region22: #{contrastive_ve_forward.1} parent=11 // pred_check_branch
          %285 = sbr.rel (%p283) target = $region24
        $region23: #{contrastive_ve_forward.1} parent=11 // pred_region
          _
        $region24: #{contrastive_ve_forward.1} parent=11 // pred_fallthru
          _
        // Predicated region
        $region25: #{contrastive_ve_forward.1} parent=11 // pred_check
          %p286 = pneg %p126
        $region26: #{contrastive_ve_forward.1} parent=11 // pred_check_branch
          %288 = sbr.rel (%p286) target = $region28
        $region27: #{contrastive_ve_forward.1} parent=11 // pred_region
          _
        $region28: #{contrastive_ve_forward.1} parent=11 // pred_fallthru
          _
        // Predicated region
        $region29: #{contrastive_ve_forward.1} parent=11 // pred_check
          %p289 = pneg %p147
        $region30: #{contrastive_ve_forward.1} parent=11 // pred_check_branch
          %291 = sbr.rel (%p289) target = $region32
        $region31: #{contrastive_ve_forward.1} parent=11 // pred_region
          _
        $region32: #{contrastive_ve_forward.1} parent=11 // pred_fallthru
          _
        // Predicated region
        $region33: #{contrastive_ve_forward.1} parent=11 // pred_check
          %p292 = pneg %p168
        $region34: #{contrastive_ve_forward.1} parent=11 // pred_check_branch
          %294 = sbr.rel (%p292) target = $region36
        $region35: #{contrastive_ve_forward.1} parent=11 // pred_region
          _
        $region36: #{contrastive_ve_forward.1} parent=11 // pred_fallthru
          _
        // Predicated region
        $region37: #{contrastive_ve_forward.1} parent=11 // pred_check
          %p295 = pneg %p189
        $region38: #{contrastive_ve_forward.1} parent=11 // pred_check_branch
          %297 = sbr.rel (%p295) target = $region40
        $region39: #{contrastive_ve_forward.1} parent=11 // pred_region
          _
        $region40: #{contrastive_ve_forward.1} parent=11 // pred_fallthru
          _
        // Predicated region
        $region41: #{contrastive_ve_forward.1} parent=11 // pred_check
          %p298 = pneg %p210
        $region42: #{contrastive_ve_forward.1} parent=11 // pred_check_branch
          %300 = sbr.rel (%p298) target = $region44
        $region43: #{contrastive_ve_forward.1} parent=11 // pred_region
          _
        $region44: #{contrastive_ve_forward.1} parent=11 // pred_fallthru
          _
      $region12: #{contrastive_ve_forward.1} parent=5 // pred_fallthru
        _
      %p301 = scmp.lt.s32.totalorder %s16, 2
      // Predicated region
      $region45: #{contrastive_ve_forward.1} parent=5 // pred_check
        %p302 = pneg %p301
      $region46: #{contrastive_ve_forward.1} parent=5 // pred_check_branch
        %304 = sbr.rel (%p302) target = $region48
      $region47: #{contrastive_ve_forward.1} parent=5 // pred_region
        // Predicated region
        $region49: #{contrastive_ve_forward.1} parent=47 // pred_check
          %p305 = pneg %p36
        $region50: #{contrastive_ve_forward.1} parent=47 // pred_check_branch
          %307 = sbr.rel (%p305) target = $region52
        $region51: #{contrastive_ve_forward.1} parent=47 // pred_region
          %s308 = sand.u32 %s26, 1
          %s309 = sand.u32 %s26, 1
          %s310 = smul.addr %s309, 192
          %s311 = scalar_lea.vmem [#allocation2], %s310
          %s312 = smul.addr %s16, 8
          %s313 = scalar_lea.vmem %s0, %s312
          // Predicated region
          $region53: #{contrastive_ve_forward.1} parent=51 // pred_check
            _
          $region54: #{contrastive_ve_forward.1} parent=51 // pred_check_branch
            %315 = sbr.rel (0) target = $region56
          $region55: #{contrastive_ve_forward.1} parent=51 // pred_region
            // Predicated region
            $region57: #{contrastive_ve_forward.1} parent=55 // pred_check
              _
            $region58: #{contrastive_ve_forward.1} parent=55 // pred_check_branch
              %317 = sbr.rel (0) target = $region60
            $region59: #{contrastive_ve_forward.1} parent=55 // pred_region
              // Predicated region
              $region72: #{contrastive_ve_forward.1} parent=59 // pred_check
                _
              $region73: #{contrastive_ve_forward.1} parent=59 // pred_check_branch
                %379 = sbr.rel (0) target = $region75
              $region74: #{contrastive_ve_forward.1} parent=59 // pred_region
                loop: start=0, step=1, limit=1
                $region76: #{contrastive_ve_forward.1} parent=74 // loop_pre_header
                  _
                $region77: #{contrastive_ve_forward.1} parent=74 // loop_header
                  %s381 = sphi 0, %s385
                  %p382 = scmp.ge.s32.totalorder %s381, 1
                  %s386 = sphi %s313, %s313
                  %s387 = sphi %s311, %s311
                $region78: #{contrastive_ve_forward.1} parent=74 // loop_header_branch
                  %384 = sbr.rel (%p382) target = $region82
                $region79: #{contrastive_ve_forward.1} parent=74 // loop_body
                  %v388 = vld [vmem:[%s386] sm:$0xff]
                  %389 = vst [vmem:[%s387] sm:$0xff] %v388
                  %v390 = vld [vmem:[%s386 + $0x10] sm:$0xff]
                  %391 = vst [vmem:[%s387 + $0x8] sm:$0xff] %v390
                  %v392 = vld [vmem:[%s386 + $0x20] sm:$0xff]
                  %393 = vst [vmem:[%s387 + $0x10] sm:$0xff] %v392
                  %v394 = vld [vmem:[%s386 + $0x30] sm:$0xff]
                  %395 = vst [vmem:[%s387 + $0x18] sm:$0xff] %v394
                  %v396 = vld [vmem:[%s386 + $0x40] sm:$0xff]
                  %397 = vst [vmem:[%s387 + $0x20] sm:$0xff] %v396
                  %v398 = vld [vmem:[%s386 + $0x50] sm:$0xff]
                  %399 = vst [vmem:[%s387 + $0x28] sm:$0xff] %v398
                  %v400 = vld [vmem:[%s386 + $0x60] sm:$0xff]
                  %401 = vst [vmem:[%s387 + $0x30] sm:$0xff] %v400
                  %v402 = vld [vmem:[%s386 + $0x70] sm:$0xff]
                  %403 = vst [vmem:[%s387 + $0x38] sm:$0xff] %v402
                  %v404 = vld [vmem:[%s386 + $0x80] sm:$0xff]
                  %405 = vst [vmem:[%s387 + $0x40] sm:$0xff] %v404
                  %v406 = vld [vmem:[%s386 + $0x90] sm:$0xff]
                  %407 = vst [vmem:[%s387 + $0x48] sm:$0xff] %v406
                  %v408 = vld [vmem:[%s386 + $0xa0] sm:$0xff]
                  %409 = vst [vmem:[%s387 + $0x50] sm:$0xff] %v408
                  %v410 = vld [vmem:[%s386 + $0xb0] sm:$0xff]
                  %411 = vst [vmem:[%s387 + $0x58] sm:$0xff] %v410
                  %v412 = vld [vmem:[%s386 + $0xc0] sm:$0xff]
                  %413 = vst [vmem:[%s387 + $0x60] sm:$0xff] %v412
                  %v414 = vld [vmem:[%s386 + $0xd0] sm:$0xff]
                  %415 = vst [vmem:[%s387 + $0x68] sm:$0xff] %v414
                  %v416 = vld [vmem:[%s386 + $0xe0] sm:$0xff]
                  %417 = vst [vmem:[%s387 + $0x70] sm:$0xff] %v416
                  %v418 = vld [vmem:[%s386 + $0xf0] sm:$0xff]
                  %419 = vst [vmem:[%s387 + $0x78] sm:$0xff] %v418
                  %v420 = vld [vmem:[%s386 + $0x100] sm:$0xff]
                  %421 = vst [vmem:[%s387 + $0x80] sm:$0xff] %v420
                  %v422 = vld [vmem:[%s386 + $0x110] sm:$0xff]
                  %423 = vst [vmem:[%s387 + $0x88] sm:$0xff] %v422
                  %v424 = vld [vmem:[%s386 + $0x120] sm:$0xff]
                  %425 = vst [vmem:[%s387 + $0x90] sm:$0xff] %v424
                  %v426 = vld [vmem:[%s386 + $0x130] sm:$0xff]
                  %427 = vst [vmem:[%s387 + $0x98] sm:$0xff] %v426
                  %v428 = vld [vmem:[%s386 + $0x140] sm:$0xff]
                  %429 = vst [vmem:[%s387 + $0xa0] sm:$0xff] %v428
                  %v430 = vld [vmem:[%s386 + $0x150] sm:$0xff]
                  %431 = vst [vmem:[%s387 + $0xa8] sm:$0xff] %v430
                  %v432 = vld [vmem:[%s386 + $0x160] sm:$0xff]
                  %433 = vst [vmem:[%s387 + $0xb0] sm:$0xff] %v432
                  %v434 = vld [vmem:[%s386 + $0x170] sm:$0xff]
                  %435 = vst [vmem:[%s387 + $0xb8] sm:$0xff] %v434
                $region80: #{contrastive_ve_forward.1} parent=74 // loop_footer
                  %s385 = sadd.s32 1, %s381
                $region81: #{contrastive_ve_forward.1} parent=74 // loop_footer_branch
                  %380 = sbr.rel target = $region77
                $region82: #{contrastive_ve_forward.1} parent=74 // loop_exit
                  _
              $region75: #{contrastive_ve_forward.1} parent=59 // pred_fallthru
                _
              // Predicated region
              $region83: #{contrastive_ve_forward.1} parent=59 // pred_check
                _
              $region84: #{contrastive_ve_forward.1} parent=59 // pred_check_branch
                %437 = sbr.rel target = $region86
              $region85: #{contrastive_ve_forward.1} parent=59 // pred_region
                _
              $region86: #{contrastive_ve_forward.1} parent=59 // pred_fallthru
                _
            $region60: #{contrastive_ve_forward.1} parent=55 // pred_fallthru
              _
            // Predicated region
            $region61: #{contrastive_ve_forward.1} parent=55 // pred_check
              _
            $region62: #{contrastive_ve_forward.1} parent=55 // pred_check_branch
              %319 = sbr.rel target = $region64
            $region63: #{contrastive_ve_forward.1} parent=55 // pred_region
              %s321 = ssub.s32 256, 1
              loop: start=0, step=1, limit=1
              $region65: #{contrastive_ve_forward.1} parent=63 // loop_pre_header
                _
              $region66: #{contrastive_ve_forward.1} parent=63 // loop_header
                %s323 = sphi 0, %s327
                %p324 = scmp.ge.s32.totalorder %s323, 1
                %s328 = sphi %s313, %s313
                %s329 = sphi %s311, %s311
              $region67: #{contrastive_ve_forward.1} parent=63 // loop_header_branch
                %326 = sbr.rel (%p324) target = $region71
              $region68: #{contrastive_ve_forward.1} parent=63 // loop_body
                %v330 = vld [vmem:[%s328] sm:%s321]
                %331 = vst [vmem:[%s329] sm:%s321] %v330
                %v332 = vld [vmem:[%s328 + $0x10] sm:%s321]
                %333 = vst [vmem:[%s329 + $0x8] sm:%s321] %v332
                %v334 = vld [vmem:[%s328 + $0x20] sm:%s321]
                %335 = vst [vmem:[%s329 + $0x10] sm:%s321] %v334
                %v336 = vld [vmem:[%s328 + $0x30] sm:%s321]
                %337 = vst [vmem:[%s329 + $0x18] sm:%s321] %v336
                %v338 = vld [vmem:[%s328 + $0x40] sm:%s321]
                %339 = vst [vmem:[%s329 + $0x20] sm:%s321] %v338
                %v340 = vld [vmem:[%s328 + $0x50] sm:%s321]
                %341 = vst [vmem:[%s329 + $0x28] sm:%s321] %v340
                %v342 = vld [vmem:[%s328 + $0x60] sm:%s321]
                %343 = vst [vmem:[%s329 + $0x30] sm:%s321] %v342
                %v344 = vld [vmem:[%s328 + $0x70] sm:%s321]
                %345 = vst [vmem:[%s329 + $0x38] sm:%s321] %v344
                %v346 = vld [vmem:[%s328 + $0x80] sm:%s321]
                %347 = vst [vmem:[%s329 + $0x40] sm:%s321] %v346
                %v348 = vld [vmem:[%s328 + $0x90] sm:%s321]
                %349 = vst [vmem:[%s329 + $0x48] sm:%s321] %v348
                %v350 = vld [vmem:[%s328 + $0xa0] sm:%s321]
                %351 = vst [vmem:[%s329 + $0x50] sm:%s321] %v350
                %v352 = vld [vmem:[%s328 + $0xb0] sm:%s321]
                %353 = vst [vmem:[%s329 + $0x58] sm:%s321] %v352
                %v354 = vld [vmem:[%s328 + $0xc0] sm:%s321]
                %355 = vst [vmem:[%s329 + $0x60] sm:%s321] %v354
                %v356 = vld [vmem:[%s328 + $0xd0] sm:%s321]
                %357 = vst [vmem:[%s329 + $0x68] sm:%s321] %v356
                %v358 = vld [vmem:[%s328 + $0xe0] sm:%s321]
                %359 = vst [vmem:[%s329 + $0x70] sm:%s321] %v358
                %v360 = vld [vmem:[%s328 + $0xf0] sm:%s321]
                %361 = vst [vmem:[%s329 + $0x78] sm:%s321] %v360
                %v362 = vld [vmem:[%s328 + $0x100] sm:%s321]
                %363 = vst [vmem:[%s329 + $0x80] sm:%s321] %v362
                %v364 = vld [vmem:[%s328 + $0x110] sm:%s321]
                %365 = vst [vmem:[%s329 + $0x88] sm:%s321] %v364
                %v366 = vld [vmem:[%s328 + $0x120] sm:%s321]
                %367 = vst [vmem:[%s329 + $0x90] sm:%s321] %v366
                %v368 = vld [vmem:[%s328 + $0x130] sm:%s321]
                %369 = vst [vmem:[%s329 + $0x98] sm:%s321] %v368
                %v370 = vld [vmem:[%s328 + $0x140] sm:%s321]
                %371 = vst [vmem:[%s329 + $0xa0] sm:%s321] %v370
                %v372 = vld [vmem:[%s328 + $0x150] sm:%s321]
                %373 = vst [vmem:[%s329 + $0xa8] sm:%s321] %v372
                %v374 = vld [vmem:[%s328 + $0x160] sm:%s321]
                %375 = vst [vmem:[%s329 + $0xb0] sm:%s321] %v374
                %v376 = vld [vmem:[%s328 + $0x170] sm:%s321]
                %377 = vst [vmem:[%s329 + $0xb8] sm:%s321] %v376
              $region69: #{contrastive_ve_forward.1} parent=63 // loop_footer
                %s327 = sadd.s32 1, %s323
              $region70: #{contrastive_ve_forward.1} parent=63 // loop_footer_branch
                %322 = sbr.rel target = $region66
              $region71: #{contrastive_ve_forward.1} parent=63 // loop_exit
                _
            $region64: #{contrastive_ve_forward.1} parent=55 // pred_fallthru
              _
          $region56: #{contrastive_ve_forward.1} parent=51 // pred_fallthru
            _
          %438 = vnop
        $region52: #{contrastive_ve_forward.1} parent=47 // pred_fallthru
          _
        // Predicated region
        $region87: #{contrastive_ve_forward.1} parent=47 // pred_check
          %p439 = pneg %p230
        $region88: #{contrastive_ve_forward.1} parent=47 // pred_check_branch
          %441 = sbr.rel (%p439) target = $region90
        $region89: #{contrastive_ve_forward.1} parent=47 // pred_region
          %p442 = scmp.lt.s32.totalorder %s16, 1
          %s443 = scalar_select %p442, %s16, 1
          %s444 = smul.addr %s443, 8
          %s445 = scalar_lea.vmem %s9, %s444
        $region90: #{contrastive_ve_forward.1} parent=47 // pred_fallthru
          _
      $region48: #{contrastive_ve_forward.1} parent=5 // pred_fallthru
        _
      %p446 = scmp.le.s32.totalorder 1, %s16
      %p447 = scmp.lt.s32.totalorder %s16, 3
      %p448 = pnand %p446, %p447
      %p449 = pneg %p448
      // Predicated region
      $region91: #{contrastive_ve_forward.1} parent=5 // pred_check
        _
      $region92: #{contrastive_ve_forward.1} parent=5 // pred_check_branch
        %451 = sbr.rel (%p448) target = $region94
      $region93: #{contrastive_ve_forward.1} parent=5 // pred_region
        %s452 = ssub.s32 %s16, 1
        %s453 = sand.u32 %s29, 1
        %s454 = sand.u32 %s29, 1
        %s455 = smul.addr %s454, 192
        %s456 = scalar_lea.vmem [#allocation2], %s455
        // Predicated region
        $region95: #{contrastive_ve_forward.1} parent=93 // pred_check
          %p457 = pneg %p42
        $region96: #{contrastive_ve_forward.1} parent=93 // pred_check_branch
          %459 = sbr.rel (%p457) target = $region98
        $region97: #{contrastive_ve_forward.1} parent=93 // pred_region
          _
        $region98: #{contrastive_ve_forward.1} parent=93 // pred_fallthru
          _
        %s460 = sand.u32 %s29, 1
        %s461 = sand.u32 %s29, 1
        %s462 = smul.addr %s461, 192
        %s463 = scalar_lea.vmem [#allocation2], %s462
        %p464 = pneg %p42
        %p465 = pneg %p39
        %p466 = pneg %p63
        %p467 = pneg %p60
        %p468 = pneg %p84
        %p469 = pneg %p81
        %p470 = pneg %p105
        %p471 = pneg %p102
        %p472 = pneg %p126
        %p473 = pneg %p123
        %p474 = pneg %p147
        %p475 = pneg %p144
        %p476 = pneg %p168
        %p477 = pneg %p165
        %p478 = pneg %p189
        %p479 = pneg %p186
        %p480 = pneg %p210
        %p481 = pneg %p207
        %p482 = scmp.lt.s32.totalorder %s21, 1
        %s483 = scalar_select %p482, %s21, 1
        %s484 = smul.addr %s483, 8
        %s485 = scalar_lea.vmem %s9, %s484
        %p486 = pneg %p236
        %p487 = pneg %p233
        %p488 = pneg %p262
        %p489 = pneg %p259
        %p490 = scmp.lt.s32.totalorder %s21, 1
        %s491 = scalar_select %p490, %s21, 1
        %s492 = smul.addr %s491, 8
        %s493 = scalar_lea.vmem %s10, %s492
        %p494 = scmp.lt.s32.totalorder %s21, 1
        %s495 = scalar_select %p494, %s21, 1
        %s496 = smul.addr %s495, 8
        %s497 = scalar_lea.vmem %s9, %s496
        %p498 = scmp.lt.s32.totalorder %s21, 1
        %s499 = scalar_select %p498, %s21, 1
        %s500 = smul.addr %s499, 8
        %s501 = scalar_lea.vmem %s10, %s500
        %v503 = vld [vmem:[%s456] sm:$0xff]
        %v504 = vld [vmem:[%s456 + $0x8] sm:$0xff]
        %v505 = vld [vmem:[%s456 + $0x10] sm:$0xff]
        %v506 = vld [vmem:[%s456 + $0x18] sm:$0xff]
        %v507 = vld [vmem:[%s456 + $0x20] sm:$0xff]
        %v508 = vld [vmem:[%s456 + $0x28] sm:$0xff]
        %v509 = vld [vmem:[%s456 + $0x30] sm:$0xff]
        %v510 = vld [vmem:[%s456 + $0x38] sm:$0xff]
        %v511 = vpack.c.bf16 %v504, %v503
        %v512 = vpack.c.bf16 %v506, %v505
        %v513 = vpack.c.bf16 %v508, %v507
        %v514 = vpack.c.bf16 %v510, %v509
        %v515 = vld [vmem:[%s1] sm:$0xf]
        %v516 = vld [vmem:[%s1 + $0x4] sm:$0xf]
        %v517 = vld [vmem:[%s1 + $0x8] sm:$0x1]
        %s518 = scalar_lea.vmem %s456, 64 [#allocation2]
        %v519 = vld [vmem:[%s518] sm:$0xff]
        %v520 = vld [vmem:[%s518 + $0x8] sm:$0xff]
        %v521 = vld [vmem:[%s518 + $0x10] sm:$0xff]
        %v522 = vld [vmem:[%s518 + $0x18] sm:$0xff]
        %v523 = vld [vmem:[%s518 + $0x20] sm:$0xff]
        %v524 = vld [vmem:[%s518 + $0x28] sm:$0xff]
        %v525 = vld [vmem:[%s518 + $0x30] sm:$0xff]
        %v526 = vld [vmem:[%s518 + $0x38] sm:$0xff]
        %v527 = vpack.c.bf16 %v520, %v519
        %v528 = vpack.c.bf16 %v522, %v521
        %v529 = vpack.c.bf16 %v524, %v523
        %v530 = vpack.c.bf16 %v526, %v525
        %s531 = scalar_lea.vmem %s1, 12
        %v532 = vld [vmem:[%s531] sm:$0xf]
        %v533 = vld [vmem:[%s531 + $0x4] sm:$0xf]
        %v534 = vld [vmem:[%s531 + $0x8] sm:$0x1]
        %v538 = vunpack.c.l.b16 %v532
        %v539 = vunpack.c.l.b16 %v533
        %v540 = vunpack.c.l.b16 %v534
        %v541 = vpack.c.b16 %v539, %v538
        %v542 = vpack.c.b16 %v540, %v540
        %vm544 = vcmask 146432
        %v546 = vsel %vm544, %v527, 0
        %v549 = vsel %vm544, %v528, 0
        %v552 = vsel %vm544, %v529, 0
        %v555 = vsel %vm544, %v530, 0
        %vm557 = vcmask 1040384
        %v559 = vsel %vm557, %v542, 0
        %561 = vmatpush.bf16.msra.mxu0 0
        %562 = vmatpush.bf16.msra.mxu0 0
        %563 = vmatpush.bf16.msra.mxu0 0
        %564 = vmatpush.bf16.msra.mxu0 0
        %565 = vmatpush.bf16.msra.mxu0 0
        %566 = vmatpush.bf16.msra.mxu0 0
        %567 = vmatpush.bf16.msra.mxu0 %v559
        %568 = vmatpush.bf16.msra.mxu0 %v541
        %569 = vmatmul.bf16.gmra.mxu0 %v546
        %v570 = vpop.f32.mrf.mxu0
        %v571 = vadd.f32 0.0, %v570
        %v572 = vpop.f32.mrf.mxu0
        %v573 = vadd.f32 0.0, %v572
        %574 = vmatmul.bf16.gmra.mxu0 %v549
        %v575 = vpop.f32.mrf.mxu0
        %v576 = vadd.f32 0.0, %v575
        %v577 = vpop.f32.mrf.mxu0
        %v578 = vadd.f32 0.0, %v577
        %579 = vmatmul.bf16.gmra.mxu0 %v552
        %v580 = vpop.f32.mrf.mxu0
        %v581 = vadd.f32 0.0, %v580
        %v582 = vpop.f32.mrf.mxu0
        %v583 = vadd.f32 0.0, %v582
        %584 = vmatmul.bf16.gmra.mxu0 %v555
        %v585 = vpop.f32.mrf.mxu0
        %v586 = vadd.f32 0.0, %v585
        %v587 = vpop.f32.mrf.mxu0
        %v588 = vadd.f32 0.0, %v587
        %589 = vdwg.mxu0
        %v593 = vunpack.c.l.b16 %v515
        %v594 = vunpack.c.l.b16 %v516
        %v595 = vunpack.c.l.b16 %v517
        %v596 = vpack.c.b16 %v594, %v593
        %v597 = vpack.c.b16 %v595, %v595
        %v600 = vsel %vm544, %v511, 0
        %v603 = vsel %vm544, %v512, 0
        %v606 = vsel %vm544, %v513, 0
        %v609 = vsel %vm544, %v514, 0
        %v612 = vsel %vm557, %v597, 0
        %614 = vmatpush.bf16.msra.mxu0 0
        %615 = vmatpush.bf16.msra.mxu0 0
        %616 = vmatpush.bf16.msra.mxu0 0
        %617 = vmatpush.bf16.msra.mxu0 0
        %618 = vmatpush.bf16.msra.mxu0 0
        %619 = vmatpush.bf16.msra.mxu0 0
        %620 = vmatpush.bf16.msra.mxu0 %v612
        %621 = vmatpush.bf16.msra.mxu0 %v596
        %622 = vmatmul.bf16.gmra.mxu0 %v600
        %v623 = vpop.f32.mrf.mxu0
        %v624 = vadd.f32 %v571, %v623
        %v625 = vpop.f32.mrf.mxu0
        %v626 = vadd.f32 %v573, %v625
        %627 = vmatmul.bf16.gmra.mxu0 %v603
        %v628 = vpop.f32.mrf.mxu0
        %v629 = vadd.f32 %v576, %v628
        %v630 = vpop.f32.mrf.mxu0
        %v631 = vadd.f32 %v578, %v630
        %632 = vmatmul.bf16.gmra.mxu0 %v606
        %v633 = vpop.f32.mrf.mxu0
        %v634 = vadd.f32 %v581, %v633
        %v635 = vpop.f32.mrf.mxu0
        %v636 = vadd.f32 %v583, %v635
        %637 = vmatmul.bf16.gmra.mxu0 %v609
        %v638 = vpop.f32.mrf.mxu0
        %v639 = vadd.f32 %v586, %v638
        %v640 = vpop.f32.mrf.mxu0
        %v641 = vadd.f32 %v588, %v640
        %642 = vdwg.mxu0
        %s643 = scalar_lea.vmem %s456, 128 [#allocation2]
        %v644 = vld [vmem:[%s643] sm:$0xff]
        %v645 = vld [vmem:[%s643 + $0x8] sm:$0xff]
        %v646 = vld [vmem:[%s643 + $0x10] sm:$0xff]
        %v647 = vld [vmem:[%s643 + $0x18] sm:$0xff]
        %v648 = vld [vmem:[%s643 + $0x20] sm:$0xff]
        %v649 = vld [vmem:[%s643 + $0x28] sm:$0xff]
        %v650 = vld [vmem:[%s643 + $0x30] sm:$0xff]
        %v651 = vld [vmem:[%s643 + $0x38] sm:$0xff]
        %v652 = vpack.c.bf16 %v645, %v644
        %v653 = vpack.c.bf16 %v647, %v646
        %v654 = vpack.c.bf16 %v649, %v648
        %v655 = vpack.c.bf16 %v651, %v650
        %s656 = scalar_lea.vmem %s1, 24
        %v657 = vld [vmem:[%s656] sm:$0xf]
        %v658 = vld [vmem:[%s656 + $0x4] sm:$0xf]
        %v659 = vld [vmem:[%s656 + $0x8] sm:$0x1]
        %v663 = vunpack.c.l.b16 %v657
        %v664 = vunpack.c.l.b16 %v658
        %v665 = vunpack.c.l.b16 %v659
        %v666 = vpack.c.b16 %v664, %v663
        %v667 = vpack.c.b16 %v665, %v665
        %v670 = vsel %vm544, %v652, 0
        %v673 = vsel %vm544, %v653, 0
        %v676 = vsel %vm544, %v654, 0
        %v679 = vsel %vm544, %v655, 0
        %v682 = vsel %vm557, %v667, 0
        %684 = vmatpush.bf16.msra.mxu0 0
        %685 = vmatpush.bf16.msra.mxu0 0
        %686 = vmatpush.bf16.msra.mxu0 0
        %687 = vmatpush.bf16.msra.mxu0 0
        %688 = vmatpush.bf16.msra.mxu0 0
        %689 = vmatpush.bf16.msra.mxu0 0
        %690 = vmatpush.bf16.msra.mxu0 %v682
        %691 = vmatpush.bf16.msra.mxu0 %v666
        %692 = vmatmul.bf16.gmra.mxu0 %v670
        %v693 = vpop.f32.mrf.mxu0
        %v694 = vadd.f32 0.0, %v693
        %v695 = vpop.f32.mrf.mxu0
        %v696 = vadd.f32 0.0, %v695
        %697 = vmatmul.bf16.gmra.mxu0 %v673
        %v698 = vpop.f32.mrf.mxu0
        %v699 = vadd.f32 0.0, %v698
        %v700 = vpop.f32.mrf.mxu0
        %v701 = vadd.f32 0.0, %v700
        %702 = vmatmul.bf16.gmra.mxu0 %v676
        %v703 = vpop.f32.mrf.mxu0
        %v704 = vadd.f32 0.0, %v703
        %v705 = vpop.f32.mrf.mxu0
        %v706 = vadd.f32 0.0, %v705
        %707 = vmatmul.bf16.gmra.mxu0 %v679
        %v708 = vpop.f32.mrf.mxu0
        %v709 = vadd.f32 0.0, %v708
        %v710 = vpop.f32.mrf.mxu0
        %v711 = vadd.f32 0.0, %v710
        %712 = vdwg.mxu0
        %v713 = vadd.f32 %v624, %v694
        %v714 = vadd.f32 %v626, %v696
        %v715 = vadd.f32 %v629, %v699
        %v716 = vadd.f32 %v631, %v701
        %v717 = vadd.f32 %v634, %v704
        %v718 = vadd.f32 %v636, %v706
        %v719 = vadd.f32 %v639, %v709
        %v720 = vadd.f32 %v641, %v711
        %v721 = vld [vmem:[%s2] sm:$0x1]
        %v723 = vperm.slane %v721, 0
        %v725 = vadd.f32 %v713, %v723
        %v726 = vadd.f32 %v714, %v723
        %v727 = vadd.f32 %v715, %v723
        %v728 = vadd.f32 %v716, %v723
        %v729 = vadd.f32 %v717, %v723
        %v730 = vadd.f32 %v718, %v723
        %v731 = vadd.f32 %v719, %v723
        %v732 = vadd.f32 %v720, %v723
        %v733 = vmax.f32 %v725, 0.0
        %v734 = vmax.f32 %v726, 0.0
        %v735 = vmax.f32 %v727, 0.0
        %v736 = vmax.f32 %v728, 0.0
        %v737 = vmax.f32 %v729, 0.0
        %v738 = vmax.f32 %v730, 0.0
        %v739 = vmax.f32 %v731, 0.0
        %v740 = vmax.f32 %v732, 0.0
        %v741 = vpack.c.bf16 %v737, 0.0
        %v742 = vpack.c.bf16 %v739, %v738
        %v743 = vld [vmem:[%s3] sm:$0xf]
        %v744 = vld [vmem:[%s3 + $0x4] sm:$0xf]
        %v745 = vld [vmem:[%s3 + $0x8] sm:$0xf]
        %v746 = vld [vmem:[%s3 + $0xc] sm:$0xf]
        %v747 = vld [vmem:[%s3 + $0x10] sm:$0xf]
        %v748 = vld [vmem:[%s3 + $0x14] sm:$0xf]
        %v749 = vld [vmem:[%s3 + $0x18] sm:$0xf]
        %v750 = vld [vmem:[%s3 + $0x1c] sm:$0xf]
        %v751 = vld [vmem:[%s3 + $0x20] sm:$0xf]
        %v752 = vld [vmem:[%s3 + $0x24] sm:$0xf]
        %v753 = vpack.c.bf16 %v734, %v733
        %v754 = vpack.c.bf16 %v736, %v735
        %s755 = scalar_lea.vmem %s3, 40
        %v756 = vld [vmem:[%s755] sm:$0xf]
        %v757 = vld [vmem:[%s755 + $0x4] sm:$0xf]
        %v758 = vld [vmem:[%s755 + $0x8] sm:$0xf]
        %v759 = vld [vmem:[%s755 + $0xc] sm:$0xf]
        %v760 = vld [vmem:[%s755 + $0x10] sm:$0xf]
        %v761 = vld [vmem:[%s755 + $0x14] sm:$0xf]
        %v762 = vld [vmem:[%s755 + $0x18] sm:$0xf]
        %v763 = vld [vmem:[%s755 + $0x1c] sm:$0xf]
        %v764 = vld [vmem:[%s755 + $0x20] sm:$0xf]
        %v765 = vld [vmem:[%s755 + $0x24] sm:$0xf]
        %v776 = vunpack.c.l.b16 %v756
        %v777 = vunpack.c.l.b16 %v757
        %v778 = vunpack.c.l.b16 %v758
        %v779 = vunpack.c.l.b16 %v759
        %v780 = vunpack.c.l.b16 %v760
        %v781 = vunpack.c.l.b16 %v761
        %v782 = vunpack.c.l.b16 %v762
        %v783 = vunpack.c.l.b16 %v763
        %v784 = vunpack.c.l.b16 %v764
        %v785 = vunpack.c.l.b16 %v765
        %v786 = vpack.c.b16 %v777, %v776
        %v787 = vpack.c.b16 %v779, %v778
        %v788 = vpack.c.b16 %v781, %v780
        %v789 = vpack.c.b16 %v783, %v782
        %v790 = vpack.c.b16 %v785, %v784
        %vm796 = vcmask 654336
        %v798 = vsel %vm796, %v753, 0
        %v801 = vsel %vm796, %v754, 0
        %803 = vmatpush.bf16.msra.mxu0 0
        %804 = vmatpush.bf16.msra.mxu0 0
        %805 = vmatpush.bf16.msra.mxu0 0
        %806 = vmatpush.bf16.msra.mxu0 %v790
        %807 = vmatpush.bf16.msra.mxu0 %v789
        %808 = vmatpush.bf16.msra.mxu0 %v788
        %809 = vmatpush.bf16.msra.mxu0 %v787
        %810 = vmatpush.bf16.msra.mxu0 %v786
        %811 = vmatmul.bf16.gmra.mxu0 %v798
        %v812 = vpop.f32.mrf.mxu0
        %v813 = vadd.f32 0.0, %v812
        %v814 = vpop.f32.mrf.mxu0
        %v815 = vadd.f32 0.0, %v814
        %816 = vmatmul.bf16.gmra.mxu0 %v801
        %v817 = vpop.f32.mrf.mxu0
        %v818 = vadd.f32 0.0, %v817
        %v819 = vpop.f32.mrf.mxu0
        %v820 = vadd.f32 0.0, %v819
        %821 = vdwg.mxu0
        %v832 = vunpack.c.l.b16 %v743
        %v833 = vunpack.c.l.b16 %v744
        %v834 = vunpack.c.l.b16 %v745
        %v835 = vunpack.c.l.b16 %v746
        %v836 = vunpack.c.l.b16 %v747
        %v837 = vunpack.c.l.b16 %v748
        %v838 = vunpack.c.l.b16 %v749
        %v839 = vunpack.c.l.b16 %v750
        %v840 = vunpack.c.l.b16 %v751
        %v841 = vunpack.c.l.b16 %v752
        %v842 = vpack.c.b16 %v833, %v832
        %v843 = vpack.c.b16 %v835, %v834
        %v844 = vpack.c.b16 %v837, %v836
        %v845 = vpack.c.b16 %v839, %v838
        %v846 = vpack.c.b16 %v841, %v840
        %v853 = vsel %vm796, %v741, 0
        %v856 = vsel %vm796, %v742, 0
        %858 = vmatpush.bf16.msra.mxu0 0
        %859 = vmatpush.bf16.msra.mxu0 0
        %860 = vmatpush.bf16.msra.mxu0 0
        %861 = vmatpush.bf16.msra.mxu0 %v846
        %862 = vmatpush.bf16.msra.mxu0 %v845
        %863 = vmatpush.bf16.msra.mxu0 %v844
        %864 = vmatpush.bf16.msra.mxu0 %v843
        %865 = vmatpush.bf16.msra.mxu0 %v842
        %866 = vmatmul.bf16.gmra.mxu0 %v853
        %v867 = vpop.f32.mrf.mxu0
        %v868 = vadd.f32 %v813, %v867
        %v869 = vpop.f32.mrf.mxu0
        %v870 = vadd.f32 %v815, %v869
        %871 = vmatmul.bf16.gmra.mxu0 %v856
        %v872 = vpop.f32.mrf.mxu0
        %v873 = vadd.f32 %v818, %v872
        %v874 = vpop.f32.mrf.mxu0
        %v875 = vadd.f32 %v820, %v874
        %876 = vdwg.mxu0
        %v877 = vpack.c.bf16 %v738, %v737
        %v878 = vpack.c.bf16 %v740, %v739
        %s879 = scalar_lea.vmem %s3, 80
        %v880 = vld [vmem:[%s879] sm:$0xf]
        %v881 = vld [vmem:[%s879 + $0x4] sm:$0xf]
        %v882 = vld [vmem:[%s879 + $0x8] sm:$0xf]
        %v883 = vld [vmem:[%s879 + $0xc] sm:$0xf]
        %v884 = vld [vmem:[%s879 + $0x10] sm:$0xf]
        %v885 = vld [vmem:[%s879 + $0x14] sm:$0xf]
        %v886 = vld [vmem:[%s879 + $0x18] sm:$0xf]
        %v887 = vld [vmem:[%s879 + $0x1c] sm:$0xf]
        %v888 = vld [vmem:[%s879 + $0x20] sm:$0xf]
        %v889 = vld [vmem:[%s879 + $0x24] sm:$0xf]
        %v900 = vunpack.c.l.b16 %v880
        %v901 = vunpack.c.l.b16 %v881
        %v902 = vunpack.c.l.b16 %v882
        %v903 = vunpack.c.l.b16 %v883
        %v904 = vunpack.c.l.b16 %v884
        %v905 = vunpack.c.l.b16 %v885
        %v906 = vunpack.c.l.b16 %v886
        %v907 = vunpack.c.l.b16 %v887
        %v908 = vunpack.c.l.b16 %v888
        %v909 = vunpack.c.l.b16 %v889
        %v910 = vpack.c.b16 %v901, %v900
        %v911 = vpack.c.b16 %v903, %v902
        %v912 = vpack.c.b16 %v905, %v904
        %v913 = vpack.c.b16 %v907, %v906
        %v914 = vpack.c.b16 %v909, %v908
        %v921 = vsel %vm796, %v877, 0
        %v924 = vsel %vm796, %v878, 0
        %926 = vmatpush.bf16.msra.mxu0 0
        %927 = vmatpush.bf16.msra.mxu0 0
        %928 = vmatpush.bf16.msra.mxu0 0
        %929 = vmatpush.bf16.msra.mxu0 %v914
        %930 = vmatpush.bf16.msra.mxu0 %v913
        %931 = vmatpush.bf16.msra.mxu0 %v912
        %932 = vmatpush.bf16.msra.mxu0 %v911
        %933 = vmatpush.bf16.msra.mxu0 %v910
        %934 = vmatmul.bf16.gmra.mxu0 %v921
        %v935 = vpop.f32.mrf.mxu0
        %v936 = vadd.f32 0.0, %v935
        %v937 = vpop.f32.mrf.mxu0
        %v938 = vadd.f32 0.0, %v937
        %939 = vmatmul.bf16.gmra.mxu0 %v924
        %v940 = vpop.f32.mrf.mxu0
        %v941 = vadd.f32 0.0, %v940
        %v942 = vpop.f32.mrf.mxu0
        %v943 = vadd.f32 0.0, %v942
        %944 = vdwg.mxu0
        %v945 = vadd.f32 %v868, %v936
        %v946 = vadd.f32 %v870, %v938
        %v947 = vadd.f32 %v873, %v941
        %v948 = vadd.f32 %v875, %v943
        %v949 = vld [vmem:[%s4] sm:$0x1]
        %v951 = vperm.slane %v949, 0
        %v953 = vadd.f32 %v945, %v951
        %v954 = vadd.f32 %v946, %v951
        %v955 = vadd.f32 %v947, %v951
        %v956 = vadd.f32 %v948, %v951
        %v957 = vmax.f32 %v953, 0.0
        %v958 = vmax.f32 %v954, 0.0
        %v959 = vmax.f32 %v955, 0.0
        %v960 = vmax.f32 %v956, 0.0
        %v961 = vpack.c.bf16 %v957, %v957
        %v962 = vpack.c.bf16 %v958, %v958
        %v963 = vpack.c.bf16 %v959, %v959
        %v964 = vpack.c.bf16 %v960, %v960
        %v965 = vld [vmem:[%s5] sm:$0xff]
        %v966 = vld [vmem:[%s5 + $0x8] sm:$0xff]
        %v967 = vld [vmem:[%s5 + $0x10] sm:$0xff]
        %v968 = vld [vmem:[%s5 + $0x18] sm:$0xff]
        %v969 = vld [vmem:[%s5 + $0x20] sm:$0xff]
        %v970 = vld [vmem:[%s5 + $0x28] sm:$0xff]
        %v971 = vld [vmem:[%s5 + $0x30] sm:$0xff]
        %v972 = vld [vmem:[%s5 + $0x38] sm:$0xff]
        %s973 = scalar_lea.vmem %s5, 64
        %v974 = vld [vmem:[%s973] sm:$0xff]
        %v975 = vld [vmem:[%s973 + $0x8] sm:$0xff]
        %v976 = vld [vmem:[%s973 + $0x10] sm:$0xff]
        %v977 = vld [vmem:[%s973 + $0x18] sm:$0xff]
        %v978 = vld [vmem:[%s973 + $0x20] sm:$0xff]
        %v979 = vld [vmem:[%s973 + $0x28] sm:$0xff]
        %v980 = vld [vmem:[%s973 + $0x30] sm:$0xff]
        %v981 = vld [vmem:[%s973 + $0x38] sm:$0xff]
        %v990 = vunpack.c.l.b16 %v974
        %v991 = vunpack.c.h.b16 %v974
        %v992 = vunpack.c.l.b16 %v975
        %v993 = vunpack.c.h.b16 %v975
        %v994 = vunpack.c.l.b16 %v976
        %v995 = vunpack.c.h.b16 %v976
        %v996 = vunpack.c.l.b16 %v977
        %v997 = vunpack.c.h.b16 %v977
        %v998 = vunpack.c.l.b16 %v978
        %v999 = vunpack.c.h.b16 %v978
        %v1000 = vunpack.c.l.b16 %v979
        %v1001 = vunpack.c.h.b16 %v979
        %v1002 = vunpack.c.l.b16 %v980
        %v1003 = vunpack.c.h.b16 %v980
        %v1004 = vunpack.c.l.b16 %v981
        %v1005 = vunpack.c.h.b16 %v981
        %v1006 = vpack.c.b16 %v992, %v990
        %v1007 = vpack.c.b16 %v993, %v991
        %v1008 = vpack.c.b16 %v996, %v994
        %v1009 = vpack.c.b16 %v997, %v995
        %v1010 = vpack.c.b16 %v1000, %v998
        %v1011 = vpack.c.b16 %v1001, %v999
        %v1012 = vpack.c.b16 %v1004, %v1002
        %v1013 = vpack.c.b16 %v1005, %v1003
        %vm1022 = vcmask 523264
        %v1024 = vsel %vm1022, %v962, 0
        %1026 = vmatpush.bf16.msra.mxu0 0
        %1027 = vmatpush.bf16.msra.mxu0 0
        %1028 = vmatpush.bf16.msra.mxu0 0
        %1029 = vmatpush.bf16.msra.mxu0 0
        %1030 = vmatpush.bf16.msra.mxu0 %v1012
        %1031 = vmatpush.bf16.msra.mxu0 %v1010
        %1032 = vmatpush.bf16.msra.mxu0 %v1008
        %1033 = vmatpush.bf16.msra.mxu0 %v1006
        %1034 = vmatmul.bf16.gmra.mxu0 %v1024
        %v1035 = vpop.f32.mrf.mxu0
        %v1036 = vadd.f32 0.0, %v1035
        %v1037 = vpop.f32.mrf.mxu0
        %1038 = vdwg.mxu0
        %1039 = vmatpush.bf16.msra.mxu0 0
        %1040 = vmatpush.bf16.msra.mxu0 0
        %1041 = vmatpush.bf16.msra.mxu0 0
        %1042 = vmatpush.bf16.msra.mxu0 0
        %1043 = vmatpush.bf16.msra.mxu0 %v1013
        %1044 = vmatpush.bf16.msra.mxu0 %v1011
        %1045 = vmatpush.bf16.msra.mxu0 %v1009
        %1046 = vmatpush.bf16.msra.mxu0 %v1007
        %1047 = vmatmul.bf16.gmra.mxu0 %v1024
        %v1048 = vpop.f32.mrf.mxu0
        %v1049 = vadd.f32 0.0, %v1048
        %v1050 = vpop.f32.mrf.mxu0
        %1051 = vdwg.mxu0
        %v1060 = vunpack.c.l.b16 %v965
        %v1061 = vunpack.c.h.b16 %v965
        %v1062 = vunpack.c.l.b16 %v966
        %v1063 = vunpack.c.h.b16 %v966
        %v1064 = vunpack.c.l.b16 %v967
        %v1065 = vunpack.c.h.b16 %v967
        %v1066 = vunpack.c.l.b16 %v968
        %v1067 = vunpack.c.h.b16 %v968
        %v1068 = vunpack.c.l.b16 %v969
        %v1069 = vunpack.c.h.b16 %v969
        %v1070 = vunpack.c.l.b16 %v970
        %v1071 = vunpack.c.h.b16 %v970
        %v1072 = vunpack.c.l.b16 %v971
        %v1073 = vunpack.c.h.b16 %v971
        %v1074 = vunpack.c.l.b16 %v972
        %v1075 = vunpack.c.h.b16 %v972
        %v1076 = vpack.c.b16 %v1062, %v1060
        %v1077 = vpack.c.b16 %v1063, %v1061
        %v1078 = vpack.c.b16 %v1066, %v1064
        %v1079 = vpack.c.b16 %v1067, %v1065
        %v1080 = vpack.c.b16 %v1070, %v1068
        %v1081 = vpack.c.b16 %v1071, %v1069
        %v1082 = vpack.c.b16 %v1074, %v1072
        %v1083 = vpack.c.b16 %v1075, %v1073
        %v1093 = vsel %vm1022, %v961, 0
        %1095 = vmatpush.bf16.msra.mxu0 0
        %1096 = vmatpush.bf16.msra.mxu0 0
        %1097 = vmatpush.bf16.msra.mxu0 0
        %1098 = vmatpush.bf16.msra.mxu0 0
        %1099 = vmatpush.bf16.msra.mxu0 %v1082
        %1100 = vmatpush.bf16.msra.mxu0 %v1080
        %1101 = vmatpush.bf16.msra.mxu0 %v1078
        %1102 = vmatpush.bf16.msra.mxu0 %v1076
        %1103 = vmatmul.bf16.gmra.mxu0 %v1093
        %v1104 = vpop.f32.mrf.mxu0
        %v1105 = vadd.f32 %v1036, %v1104
        %v1106 = vpop.f32.mrf.mxu0
        %1107 = vdwg.mxu0
        %1108 = vmatpush.bf16.msra.mxu0 0
        %1109 = vmatpush.bf16.msra.mxu0 0
        %1110 = vmatpush.bf16.msra.mxu0 0
        %1111 = vmatpush.bf16.msra.mxu0 0
        %1112 = vmatpush.bf16.msra.mxu0 %v1083
        %1113 = vmatpush.bf16.msra.mxu0 %v1081
        %1114 = vmatpush.bf16.msra.mxu0 %v1079
        %1115 = vmatpush.bf16.msra.mxu0 %v1077
        %1116 = vmatmul.bf16.gmra.mxu0 %v1093
        %v1117 = vpop.f32.mrf.mxu0
        %v1118 = vadd.f32 %v1049, %v1117
        %v1119 = vpop.f32.mrf.mxu0
        %1120 = vdwg.mxu0
        %s1121 = scalar_lea.vmem %s5, 128
        %v1122 = vld [vmem:[%s1121] sm:$0xff]
        %v1123 = vld [vmem:[%s1121 + $0x8] sm:$0xff]
        %v1124 = vld [vmem:[%s1121 + $0x10] sm:$0xff]
        %v1125 = vld [vmem:[%s1121 + $0x18] sm:$0xff]
        %v1126 = vld [vmem:[%s1121 + $0x20] sm:$0xff]
        %v1127 = vld [vmem:[%s1121 + $0x28] sm:$0xff]
        %v1128 = vld [vmem:[%s1121 + $0x30] sm:$0xff]
        %v1129 = vld [vmem:[%s1121 + $0x38] sm:$0xff]
        %v1138 = vunpack.c.l.b16 %v1122
        %v1139 = vunpack.c.h.b16 %v1122
        %v1140 = vunpack.c.l.b16 %v1123
        %v1141 = vunpack.c.h.b16 %v1123
        %v1142 = vunpack.c.l.b16 %v1124
        %v1143 = vunpack.c.h.b16 %v1124
        %v1144 = vunpack.c.l.b16 %v1125
        %v1145 = vunpack.c.h.b16 %v1125
        %v1146 = vunpack.c.l.b16 %v1126
        %v1147 = vunpack.c.h.b16 %v1126
        %v1148 = vunpack.c.l.b16 %v1127
        %v1149 = vunpack.c.h.b16 %v1127
        %v1150 = vunpack.c.l.b16 %v1128
        %v1151 = vunpack.c.h.b16 %v1128
        %v1152 = vunpack.c.l.b16 %v1129
        %v1153 = vunpack.c.h.b16 %v1129
        %v1154 = vpack.c.b16 %v1140, %v1138
        %v1155 = vpack.c.b16 %v1141, %v1139
        %v1156 = vpack.c.b16 %v1144, %v1142
        %v1157 = vpack.c.b16 %v1145, %v1143
        %v1158 = vpack.c.b16 %v1148, %v1146
        %v1159 = vpack.c.b16 %v1149, %v1147
        %v1160 = vpack.c.b16 %v1152, %v1150
        %v1161 = vpack.c.b16 %v1153, %v1151
        %v1171 = vsel %vm1022, %v963, 0
        %1173 = vmatpush.bf16.msra.mxu0 0
        %1174 = vmatpush.bf16.msra.mxu0 0
        %1175 = vmatpush.bf16.msra.mxu0 0
        %1176 = vmatpush.bf16.msra.mxu0 0
        %1177 = vmatpush.bf16.msra.mxu0 %v1160
        %1178 = vmatpush.bf16.msra.mxu0 %v1158
        %1179 = vmatpush.bf16.msra.mxu0 %v1156
        %1180 = vmatpush.bf16.msra.mxu0 %v1154
        %1181 = vmatmul.bf16.gmra.mxu0 %v1171
        %v1182 = vpop.f32.mrf.mxu0
        %v1183 = vadd.f32 0.0, %v1182
        %v1184 = vpop.f32.mrf.mxu0
        %1185 = vdwg.mxu0
        %1186 = vmatpush.bf16.msra.mxu0 0
        %1187 = vmatpush.bf16.msra.mxu0 0
        %1188 = vmatpush.bf16.msra.mxu0 0
        %1189 = vmatpush.bf16.msra.mxu0 0
        %1190 = vmatpush.bf16.msra.mxu0 %v1161
        %1191 = vmatpush.bf16.msra.mxu0 %v1159
        %1192 = vmatpush.bf16.msra.mxu0 %v1157
        %1193 = vmatpush.bf16.msra.mxu0 %v1155
        %1194 = vmatmul.bf16.gmra.mxu0 %v1171
        %v1195 = vpop.f32.mrf.mxu0
        %v1196 = vadd.f32 0.0, %v1195
        %v1197 = vpop.f32.mrf.mxu0
        %1198 = vdwg.mxu0
        %v1199 = vadd.f32 %v1105, %v1183
        %v1200 = vadd.f32 %v1118, %v1196
        %s1201 = scalar_lea.vmem %s5, 192
        %v1202 = vld [vmem:[%s1201] sm:$0xff]
        %v1203 = vld [vmem:[%s1201 + $0x8] sm:$0xff]
        %v1204 = vld [vmem:[%s1201 + $0x10] sm:$0xff]
        %v1205 = vld [vmem:[%s1201 + $0x18] sm:$0xff]
        %v1206 = vld [vmem:[%s1201 + $0x20] sm:$0xff]
        %v1207 = vld [vmem:[%s1201 + $0x28] sm:$0xff]
        %v1208 = vld [vmem:[%s1201 + $0x30] sm:$0xff]
        %v1209 = vld [vmem:[%s1201 + $0x38] sm:$0xff]
        %v1218 = vunpack.c.l.b16 %v1202
        %v1219 = vunpack.c.h.b16 %v1202
        %v1220 = vunpack.c.l.b16 %v1203
        %v1221 = vunpack.c.h.b16 %v1203
        %v1222 = vunpack.c.l.b16 %v1204
        %v1223 = vunpack.c.h.b16 %v1204
        %v1224 = vunpack.c.l.b16 %v1205
        %v1225 = vunpack.c.h.b16 %v1205
        %v1226 = vunpack.c.l.b16 %v1206
        %v1227 = vunpack.c.h.b16 %v1206
        %v1228 = vunpack.c.l.b16 %v1207
        %v1229 = vunpack.c.h.b16 %v1207
        %v1230 = vunpack.c.l.b16 %v1208
        %v1231 = vunpack.c.h.b16 %v1208
        %v1232 = vunpack.c.l.b16 %v1209
        %v1233 = vunpack.c.h.b16 %v1209
        %v1234 = vpack.c.b16 %v1220, %v1218
        %v1235 = vpack.c.b16 %v1221, %v1219
        %v1236 = vpack.c.b16 %v1224, %v1222
        %v1237 = vpack.c.b16 %v1225, %v1223
        %v1238 = vpack.c.b16 %v1228, %v1226
        %v1239 = vpack.c.b16 %v1229, %v1227
        %v1240 = vpack.c.b16 %v1232, %v1230
        %v1241 = vpack.c.b16 %v1233, %v1231
        %v1251 = vsel %vm1022, %v964, 0
        %1253 = vmatpush.bf16.msra.mxu0 0
        %1254 = vmatpush.bf16.msra.mxu0 0
        %1255 = vmatpush.bf16.msra.mxu0 0
        %1256 = vmatpush.bf16.msra.mxu0 0
        %1257 = vmatpush.bf16.msra.mxu0 %v1240
        %1258 = vmatpush.bf16.msra.mxu0 %v1238
        %1259 = vmatpush.bf16.msra.mxu0 %v1236
        %1260 = vmatpush.bf16.msra.mxu0 %v1234
        %1261 = vmatmul.bf16.gmra.mxu0 %v1251
        %v1262 = vpop.f32.mrf.mxu0
        %v1263 = vadd.f32 0.0, %v1262
        %v1264 = vpop.f32.mrf.mxu0
        %1265 = vdwg.mxu0
        %1266 = vmatpush.bf16.msra.mxu0 0
        %1267 = vmatpush.bf16.msra.mxu0 0
        %1268 = vmatpush.bf16.msra.mxu0 0
        %1269 = vmatpush.bf16.msra.mxu0 0
        %1270 = vmatpush.bf16.msra.mxu0 %v1241
        %1271 = vmatpush.bf16.msra.mxu0 %v1239
        %1272 = vmatpush.bf16.msra.mxu0 %v1237
        %1273 = vmatpush.bf16.msra.mxu0 %v1235
        %1274 = vmatmul.bf16.gmra.mxu0 %v1251
        %v1275 = vpop.f32.mrf.mxu0
        %v1276 = vadd.f32 0.0, %v1275
        %v1277 = vpop.f32.mrf.mxu0
        %1278 = vdwg.mxu0
        %v1279 = vadd.f32 %v1199, %v1263
        %v1280 = vadd.f32 %v1200, %v1276
        %v1281 = vld [vmem:[%s6] sm:$0x3]
        %v1283 = vperm.slane %v1281, 0
        %v1284 = vperm.slane %v1281, 1
        %v1287 = vadd.f32 %v1279, %v1283
        %v1288 = vadd.f32 %v1280, %v1284
        %v1289 = vpack.c.bf16 %v1287, %v1287
        %v1290 = vpack.c.bf16 %v1288, %v1288
        %v1291 = vld [vmem:[%s7] sm:$0xf]
        %v1292 = vld [vmem:[%s7 + $0x4] sm:$0xf]
        %v1293 = vld [vmem:[%s7 + $0x8] sm:$0xf]
        %v1294 = vld [vmem:[%s7 + $0xc] sm:$0xf]
        %v1295 = vld [vmem:[%s7 + $0x10] sm:$0xf]
        %v1296 = vld [vmem:[%s7 + $0x14] sm:$0xf]
        %v1297 = vld [vmem:[%s7 + $0x18] sm:$0xf]
        %v1298 = vld [vmem:[%s7 + $0x1c] sm:$0xf]
        %v1299 = vld [vmem:[%s7 + $0x20] sm:$0xf]
        %v1300 = vld [vmem:[%s7 + $0x24] sm:$0xf]
        %v1301 = vld [vmem:[%s7 + $0x28] sm:$0xf]
        %v1302 = vld [vmem:[%s7 + $0x2c] sm:$0xf]
        %v1303 = vld [vmem:[%s7 + $0x30] sm:$0xf]
        %v1304 = vld [vmem:[%s7 + $0x34] sm:$0xf]
        %v1305 = vld [vmem:[%s7 + $0x38] sm:$0xf]
        %v1306 = vld [vmem:[%s7 + $0x3c] sm:$0xf]
        %v1307 = vld [vmem:[%s7 + $0x40] sm:$0xf]
        %v1308 = vld [vmem:[%s7 + $0x44] sm:$0xf]
        %v1309 = vld [vmem:[%s7 + $0x48] sm:$0xf]
        %v1310 = vld [vmem:[%s7 + $0x4c] sm:$0xf]
        %v1311 = vld [vmem:[%s7 + $0x50] sm:$0xf]
        %v1312 = vld [vmem:[%s7 + $0x54] sm:$0xf]
        %v1313 = vld [vmem:[%s7 + $0x58] sm:$0xf]
        %v1314 = vld [vmem:[%s7 + $0x5c] sm:$0xf]
        %v1315 = vld [vmem:[%s7 + $0x60] sm:$0xf]
        %v1316 = vld [vmem:[%s7 + $0x64] sm:$0xf]
        %v1317 = vld [vmem:[%s7 + $0x68] sm:$0xf]
        %v1318 = vld [vmem:[%s7 + $0x6c] sm:$0xf]
        %v1319 = vld [vmem:[%s7 + $0x70] sm:$0xf]
        %v1320 = vld [vmem:[%s7 + $0x74] sm:$0xf]
        %v1321 = vld [vmem:[%s7 + $0x78] sm:$0xf]
        %v1322 = vld [vmem:[%s7 + $0x7c] sm:$0xf]
        %v1323 = vld [vmem:[%s8] sm:$0x1]
        %v1325 = vperm.slane %v1323, 0
        %v1359 = vunpack.c.l.b16 %v1291
        %v1360 = vunpack.c.l.b16 %v1292
        %v1361 = vunpack.c.l.b16 %v1293
        %v1362 = vunpack.c.l.b16 %v1294
        %v1363 = vunpack.c.l.b16 %v1295
        %v1364 = vunpack.c.l.b16 %v1296
        %v1365 = vunpack.c.l.b16 %v1297
        %v1366 = vunpack.c.l.b16 %v1298
        %v1367 = vunpack.c.l.b16 %v1299
        %v1368 = vunpack.c.l.b16 %v1300
        %v1369 = vunpack.c.l.b16 %v1301
        %v1370 = vunpack.c.l.b16 %v1302
        %v1371 = vunpack.c.l.b16 %v1303
        %v1372 = vunpack.c.l.b16 %v1304
        %v1373 = vunpack.c.l.b16 %v1305
        %v1374 = vunpack.c.l.b16 %v1306
        %v1375 = vunpack.c.l.b16 %v1307
        %v1376 = vunpack.c.l.b16 %v1308
        %v1377 = vunpack.c.l.b16 %v1309
        %v1378 = vunpack.c.l.b16 %v1310
        %v1379 = vunpack.c.l.b16 %v1311
        %v1380 = vunpack.c.l.b16 %v1312
        %v1381 = vunpack.c.l.b16 %v1313
        %v1382 = vunpack.c.l.b16 %v1314
        %v1383 = vunpack.c.l.b16 %v1315
        %v1384 = vunpack.c.l.b16 %v1316
        %v1385 = vunpack.c.l.b16 %v1317
        %v1386 = vunpack.c.l.b16 %v1318
        %v1387 = vunpack.c.l.b16 %v1319
        %v1388 = vunpack.c.l.b16 %v1320
        %v1389 = vunpack.c.l.b16 %v1321
        %v1390 = vunpack.c.l.b16 %v1322
        %v1391 = vpack.c.b16 %v1360, %v1359
        %v1392 = vpack.c.b16 %v1362, %v1361
        %v1393 = vpack.c.b16 %v1364, %v1363
        %v1394 = vpack.c.b16 %v1366, %v1365
        %v1395 = vpack.c.b16 %v1368, %v1367
        %v1396 = vpack.c.b16 %v1370, %v1369
        %v1397 = vpack.c.b16 %v1372, %v1371
        %v1398 = vpack.c.b16 %v1374, %v1373
        %v1399 = vpack.c.b16 %v1376, %v1375
        %v1400 = vpack.c.b16 %v1378, %v1377
        %v1401 = vpack.c.b16 %v1380, %v1379
        %v1402 = vpack.c.b16 %v1382, %v1381
        %v1403 = vpack.c.b16 %v1384, %v1383
        %v1404 = vpack.c.b16 %v1386, %v1385
        %v1405 = vpack.c.b16 %v1388, %v1387
        %v1406 = vpack.c.b16 %v1390, %v1389
        %1423 = vmatpush.bf16.msra.mxu0 %v1398
        %1424 = vmatpush.bf16.msra.mxu0 %v1397
        %1425 = vmatpush.bf16.msra.mxu0 %v1396
        %1426 = vmatpush.bf16.msra.mxu0 %v1395
        %1427 = vmatpush.bf16.msra.mxu0 %v1394
        %1428 = vmatpush.bf16.msra.mxu0 %v1393
        %1429 = vmatpush.bf16.msra.mxu0 %v1392
        %1430 = vmatpush.bf16.msra.mxu0 %v1391
        %1431 = vmatmul.bf16.gmra.mxu0 %v1289
        %v1432 = vpop.f32.mrf.mxu0
        %v1433 = vadd.f32 %v1325, %v1432
        %v1434 = vpop.f32.mrf.mxu0
        %1435 = vdwg.mxu0
        %1436 = vmatpush.bf16.msra.mxu0 %v1406
        %1437 = vmatpush.bf16.msra.mxu0 %v1405
        %1438 = vmatpush.bf16.msra.mxu0 %v1404
        %1439 = vmatpush.bf16.msra.mxu0 %v1403
        %1440 = vmatpush.bf16.msra.mxu0 %v1402
        %1441 = vmatpush.bf16.msra.mxu0 %v1401
        %1442 = vmatpush.bf16.msra.mxu0 %v1400
        %1443 = vmatpush.bf16.msra.mxu0 %v1399
        %1444 = vmatmul.bf16.gmra.mxu0 %v1290
        %v1445 = vpop.f32.mrf.mxu0
        %v1446 = vadd.f32 %v1433, %v1445
        %v1447 = vpop.f32.mrf.mxu0
        %1448 = vdwg.mxu0
        %v1449 = vld [vmem:[%s497] sm:$0xff]
        %v1450 = vmul.f32 %v1446, 0.5
        %v1451 = vmul.f32 %v1450, 1.442695
        %v1452 = vpow.pop %v1451
        %1454 = vrot.lane.b32.xlu0 %v1452, 112
        %v1455 = vpop.permute.xlu0 %1454
        %v1457 = vmul.f32 %v1449, %v1455
        %1459 = vrot.lane.b32.xlu0 %v1457, 8
        %v1460 = vpop.permute.xlu0 %1459
        %v1462 = vadd.f32 %v1446, %v1460
        %1464 = vrot.lane.b32.xlu0 %v1462, 120
        %v1465 = vpop.permute.xlu0 %1464
        %vm1467 = vcmask 64512
        %v1468 = vsel %vm1467, %v1465, 0.0
        %v1469 = vadd.f32 %v1446, %v1468
        %1470 = vst [vmem:[%s501] sm:$0xff] %v1469
        %p1471 = scmp.lt.s32.totalorder %s21, 1
        %s1472 = scalar_select %p1471, %s21, 1
        %s1473 = smul.addr %s1472, 8
        %s1474 = scalar_lea.vmem %s10, %s1473
        // Predicated region
        $region99: #{contrastive_ve_forward.1} parent=93 // pred_check
          %p1475 = pneg %p259
        $region100: #{contrastive_ve_forward.1} parent=93 // pred_check_branch
          %1477 = sbr.rel (%p1475) target = $region102
        $region101: #{contrastive_ve_forward.1} parent=93 // pred_region
          _
        $region102: #{contrastive_ve_forward.1} parent=93 // pred_fallthru
          _
      $region94: #{contrastive_ve_forward.1} parent=5 // pred_fallthru
        _
      %p1478 = scmp.le.s32.totalorder 2, %s16
      // Predicated region
      $region103: #{contrastive_ve_forward.1} parent=5 // pred_check
        %p1479 = pneg %p1478
      $region104: #{contrastive_ve_forward.1} parent=5 // pred_check_branch
        %1481 = sbr.rel (%p1479) target = $region106
      $region105: #{contrastive_ve_forward.1} parent=5 // pred_region
        %s1482 = ssub.s32 %s16, 2
        // Predicated region
        $region107: #{contrastive_ve_forward.1} parent=105 // pred_check
          %p1483 = pneg %p265
        $region108: #{contrastive_ve_forward.1} parent=105 // pred_check_branch
          %1485 = sbr.rel (%p1483) target = $region110
        $region109: #{contrastive_ve_forward.1} parent=105 // pred_region
          %p1486 = scmp.lt.s32.totalorder %s22, 1
          %s1487 = scalar_select %p1486, %s22, 1
          %s1488 = smul.addr %s1487, 8
          %s1489 = scalar_lea.vmem %s10, %s1488
        $region110: #{contrastive_ve_forward.1} parent=105 // pred_fallthru
          _
      $region106: #{contrastive_ve_forward.1} parent=5 // pred_fallthru
        _
    $region6: #{contrastive_ve_forward.1} parent=1 // loop_footer
      %s20 = sadd.s32 1, %s16
    $region7: #{contrastive_ve_forward.1} parent=1 // loop_footer_branch
      %15 = sbr.rel target = $region3
    $region8: #{contrastive_ve_forward.1} parent=1 // loop_exit
      _

</llo_original>
